<compile_context>
chip_gen: v5e
topology: v5e:2x2
jax: 0.10.0
libtpu: 0.0.40
codegen_flags: <defaults>
</compile_context>

<pallas_src>
import functools

import jax
import jax.numpy as jnp
from jax.experimental import pallas as pl
from jax.experimental.pallas import tpu as pltpu

# ---------------------------------------------------------------------------
# deterministic "calibrated" activation scales (QuantAct parameters)
# ---------------------------------------------------------------------------
S_X     = 0.02            # input int8 scale
S_QKV   = 0.02            # in_proj output int8 scale (s_qkv)
S_QK    = 0.02            # qk_act output int8 scale
S_SM16  = 1.0 / 32767.0   # IntSoftMax int16 grid
S_SM8   = 1.0 / 127.0     # softmax_act uint7 grid
S_AOUT  = 0.01            # attnout_act int8 scale
S_FINAL = 0.01            # out_proj output int8 scale (returned s_aout)


# ---------------------------------------------------------------------------
# fused Pallas kernel (one grid step per batch element)
# ---------------------------------------------------------------------------
def _fused_quant_msa_kernel(scales_ref, x_ref, w_in_ref, b_in_ref,
                            w_out_ref, b_out_ref, o_ref, attn_ref,
                            *, H, D, E, req_qk, s_qk, req_sm8,
                            req_aout, s_final):
    # runtime requant scales (SMEM scalars)
    inv_s_x = scales_ref[0]            # 1 / s_x
    req_in  = scales_ref[1]            # s_x * s_w_in / S_QKV
    req_out = scales_ref[2]            # S_AOUT * s_w_out / S_FINAL

    # [1] in_proj: integer GEMM (bf16 operands are exact for |int| <= 128), f32 acc.
    x_int = jnp.clip(jnp.round(x_ref[0] * inv_s_x), -128.0, 127.0)        # (S, E) int8 grid
    x_int = x_int.astype(jnp.bfloat16)
    acc = jnp.dot(x_int, w_in_ref[...], preferred_element_type=jnp.float32)  # (S, 3E)
    acc = acc + b_in_ref[...]                                             # bias on int32 grid
    qkv = jnp.clip(jnp.round(acc * req_in), -128.0, 127.0)                # int8-grid integers
    qkv = qkv.astype(jnp.bfloat16)

    # [2]-[4] per-head attention; heads are static in-VMEM lane slices of qkv.
    for h in range(H):
        c0 = h * D
        q_h = qkv[:, c0:c0 + D]                                           # (S, D)
        k_h = qkv[:, E + c0:E + c0 + D]                                   # (S, D)
        v_h = qkv[:, 2 * E + c0:2 * E + c0 + D]                           # (S, D)

        # [2] q @ k^T (int32 accumulate) -> /sqrt(d_k) -> requant to int8 grid
        sc = jax.lax.dot_general(q_h, k_h, (((1,), (1,)), ((), ())),
                                 preferred_element_type=jnp.float32)      # (S, S) ints
        sc_i8 = jnp.clip(jnp.round(sc * req_qk), -128.0, 127.0)
        sc_hat = sc_i8 * s_qk                                             # fake-quant scores

        # [3] softmax -> int16 grid -> uint7 grid
        # TODO(synk): exact IntSoftMax / LogSqrt2Quantizer integer approximations are
        # not reproducible without their source; using softmax + grid re-quantization.
        m = jnp.max(sc_hat, axis=-1, keepdims=True)
        e = jnp.exp(sc_hat - m)
        p = e * pl.reciprocal(jnp.sum(e, axis=-1, keepdims=True), approx=True)
        p16 = jnp.clip(jnp.round(p * 32767.0), 0.0, 32767.0)              # int16-grid ints
        p8 = jnp.clip(jnp.round(p16 * req_sm8), 0.0, 127.0)               # uint7-grid ints

        # [4] attn @ v (int32 accumulate) -> requant to int8 grid
        ao = jnp.dot(p8.astype(jnp.bfloat16), v_h,
                     preferred_element_type=jnp.float32)                  # (S, D) ints
        attn_ref[:, c0:c0 + D] = jnp.clip(jnp.round(ao * req_aout), -128.0, 127.0)

    # [5] out_proj on the merged (S, E) lane-dense slab: int GEMM -> int32 -> int8.
    a_int = attn_ref[...].astype(jnp.bfloat16)                            # (S, E), |int|<=128
    acc2 = jnp.dot(a_int, w_out_ref[...], preferred_element_type=jnp.float32)
    acc2 = acc2 + b_out_ref[...]
    o_ref[0] = jnp.clip(jnp.round(acc2 * req_out), -128.0, 127.0) * s_final


# ---------------------------------------------------------------------------
# wrapper: weight fake-quantization + single pallas_call
# ---------------------------------------------------------------------------
def _quantize_weight_int8(w):
    s_w = jnp.max(jnp.abs(w)) / 127.0
    w_int = jnp.round(w / s_w)                  # integer-grid values in [-127, 127]
    return w_int, s_w


@functools.partial(jax.jit, static_argnames=("num_heads",))
def quant_msa_forward(x_hat, s_x, w_in, b_in, w_out, b_out, *, num_heads):
    B, S, E = x_hat.shape
    H = num_heads
    D = E // H

    # --- parameter fake-quantization (QuantLinearWithWeight), integer-grid storage ---
    w_in_int, s_w_in = _quantize_weight_int8(w_in)          # (3E, E)
    w_out_int, s_w_out = _quantize_weight_int8(w_out)       # (E, E)
    w_in_t = w_in_int.T.astype(jnp.bfloat16)                # (E, 3E), exact (ints <= 127)
    w_out_t = w_out_int.T.astype(jnp.bfloat16)              # (E, E)

    s_x_f = jnp.asarray(s_x, jnp.float32)
    b_in_i32 = jnp.round(b_in / (s_x_f * s_w_in)).reshape(1, 3 * E).astype(jnp.float32)
    b_out_i32 = jnp.round(b_out / (S_AOUT * s_w_out)).reshape(1, E).astype(jnp.float32)

    # runtime requant scales -> SMEM
    scales = jnp.stack([
        1.0 / s_x_f,
        s_x_f * s_w_in / S_QKV,
        S_AOUT * s_w_out / S_FINAL,
        jnp.asarray(0.0, jnp.float32),
    ]).astype(jnp.float32)

    kernel = functools.partial(
        _fused_quant_msa_kernel, H=H, D=D, E=E,
        req_qk=float(S_QKV * S_QKV / (float(D) ** 0.5 * S_QK)),
        s_qk=float(S_QK),
        req_sm8=float(S_SM16 / S_SM8),
        req_aout=float(S_SM8 * S_QKV / S_AOUT),
        s_final=float(S_FINAL),
    )

    flops = (2 * B * S * E * 3 * E) + (4 * B * H * S * S * D) + (2 * B * S * E * E)
    bytes_accessed = (2 * B * S * E * 4            # x in + out
                      + E * 3 * E * 2 + E * E * 2  # bf16 weights
                      + (3 * E + E) * 4 + 16)      # biases + scales

    out = pl.pallas_call(
        kernel,
        grid=(B,),
        in_specs=[
            pl.BlockSpec(memory_space=pltpu.MemorySpace.SMEM),      # scales
            pl.BlockSpec((1, S, E), lambda b: (b, 0, 0)),           # x_hat
            pl.BlockSpec((E, 3 * E), lambda b: (0, 0)),             # w_in^T (resident)
            pl.BlockSpec((1, 3 * E), lambda b: (0, 0)),             # b_in (int32 grid)
            pl.BlockSpec((E, E), lambda b: (0, 0)),                 # w_out^T (resident)
            pl.BlockSpec((1, E), lambda b: (0, 0)),                 # b_out (int32 grid)
        ],
        out_specs=pl.BlockSpec((1, S, E), lambda b: (b, 0, 0)),
        out_shape=jax.ShapeDtypeStruct((B, S, E), jnp.float32),
        scratch_shapes=[pltpu.VMEM((S, E), jnp.float32)],           # merged attention slab
        compiler_params=pltpu.CompilerParams(dimension_semantics=("parallel",)),
        cost_estimate=pl.CostEstimate(flops=flops,
                                      transcendentals=B * H * S * S,
                                      bytes_accessed=bytes_accessed),
    )(scales, x_hat, w_in_t, b_in_i32, w_out_t, b_out_i32)

    return out, jnp.float32(S_FINAL)


# ---------------------------------------------------------------------------
if __name__ == "__main__":
    B, S, H, D = 2, 8, 12, 8      # num_heads must be 12 per the module assert
    E = H * D                     # 96

    key = jax.random.PRNGKey(0)
    k1, k2, k3, k4, k5 = jax.random.split(key, 5)
    w_in = jax.random.normal(k1, (3 * E, E), jnp.float32) * 0.02
    b_in = jax.random.normal(k2, (3 * E,), jnp.float32) * 0.02
    w_out = jax.random.normal(k3, (E, E), jnp.float32) * 0.02
    b_out = jax.random.normal(k4, (E,), jnp.float32) * 0.02

    # input already on the int8 grid with scale S_X (x_hat = s_x * x_int8)
    x_int8 = jax.random.randint(k5, (B, S, E), -128, 128)
    x_hat = x_int8.astype(jnp.float32) * S_X

    out_hat, s_out = quant_msa_forward(x_hat, S_X, w_in, b_in, w_out, b_out, num_heads=H)
    jax.block_until_ready(out_hat)
    assert out_hat.shape == (B, S, E)
    print("KERNEL_OK")
</pallas_src>

<mosaic_0001>
module attributes {stable_mosaic.version = 11 : i64} {
  func.func @_fused_quant_msa_kernel(%arg0: i32, %arg1: memref<4xf32, #tpu.memory_space<smem>>, %arg2: memref<1x8x96xf32, #tpu.memory_space<vmem>>, %arg3: memref<96x288xbf16, #tpu.memory_space<vmem>>, %arg4: memref<1x288xf32, #tpu.memory_space<vmem>>, %arg5: memref<96x96xbf16, #tpu.memory_space<vmem>>, %arg6: memref<1x96xf32, #tpu.memory_space<vmem>>, %arg7: memref<1x8x96xf32, #tpu.memory_space<vmem>>, %arg8: memref<8x96xf32, #tpu.memory_space<vmem>>) attributes {dimension_semantics = [#tpu.dimension_semantics<parallel>], iteration_bounds = array<i64: 2>, scalar_prefetch = 0 : i64, scratch_operands = 1 : i64, tpu.core_type = #tpu.core_type<tc>, window_params = [{transform_indices = @transform_0, window_bounds = array<i64: 4>}, {transform_indices = @transform_1, window_bounds = array<i64: 1, 8, 96>}, {pipeline_mode = #tpu.pipeline_mode<synchronous>, transform_indices = @transform_2, window_bounds = array<i64: 96, 288>}, {pipeline_mode = #tpu.pipeline_mode<synchronous>, transform_indices = @transform_3, window_bounds = array<i64: 1, 288>}, {pipeline_mode = #tpu.pipeline_mode<synchronous>, transform_indices = @transform_4, window_bounds = array<i64: 96, 96>}, {pipeline_mode = #tpu.pipeline_mode<synchronous>, transform_indices = @transform_5, window_bounds = array<i64: 1, 96>}, {transform_indices = @transform_6, window_bounds = array<i64: 1, 8, 96>}]} {
    %c0 = arith.constant 0 : index
    %0 = memref.load %arg1[%c0] : memref<4xf32, #tpu.memory_space<smem>>
    %c1 = arith.constant 1 : index
    %1 = memref.load %arg1[%c1] : memref<4xf32, #tpu.memory_space<smem>>
    %c2 = arith.constant 2 : index
    %2 = memref.load %arg1[%c2] : memref<4xf32, #tpu.memory_space<smem>>
    %c0_0 = arith.constant 0 : index
    %c0_1 = arith.constant 0 : index
    %c0_2 = arith.constant 0 : index
    %3 = vector.load %arg2[%c0_0, %c0_1, %c0_2] : memref<1x8x96xf32, #tpu.memory_space<vmem>>, vector<1x8x96xf32>
    %4 = vector.shape_cast %3 : vector<1x8x96xf32> to vector<8x96xf32>
    %5 = vector.broadcast %0 : f32 to vector<8x96xf32>
    %6 = arith.mulf %4, %5 : vector<8x96xf32>
    %7 = math.roundeven %6 : vector<8x96xf32>
    %cst = arith.constant -1.280000e+02 : f32
    %cst_3 = arith.constant 1.270000e+02 : f32
    %8 = vector.broadcast %cst : f32 to vector<8x96xf32>
    %9 = arith.maximumf %8, %7 : vector<8x96xf32>
    %10 = vector.broadcast %cst_3 : f32 to vector<8x96xf32>
    %11 = arith.minimumf %10, %9 : vector<8x96xf32>
    %12 = arith.truncf %11 : vector<8x96xf32> to vector<8x96xbf16>
    %c0_4 = arith.constant 0 : index
    %c0_5 = arith.constant 0 : index
    %13 = vector.load %arg3[%c0_4, %c0_5] : memref<96x288xbf16, #tpu.memory_space<vmem>>, vector<96x288xbf16>
    %cst_6 = arith.constant dense<0.000000e+00> : vector<8x288xf32>
    %14 = tpu.matmul %12, %13, %cst_6 {dimension_numbers = #tpu.dot_dimension_numbers<[1], [0], [0], [1], [0, 0, 1, 1], [], []>} : vector<8x96xbf16>, vector<96x288xbf16>, vector<8x288xf32> -> vector<8x288xf32>
    %c0_7 = arith.constant 0 : index
    %c0_8 = arith.constant 0 : index
    %15 = vector.load %arg4[%c0_7, %c0_8] : memref<1x288xf32, #tpu.memory_space<vmem>>, vector<1x288xf32>
    %16 = vector.broadcast %15 : vector<1x288xf32> to vector<8x288xf32>
    %17 = arith.addf %14, %16 : vector<8x288xf32>
    %18 = vector.broadcast %1 : f32 to vector<8x288xf32>
    %19 = arith.mulf %17, %18 : vector<8x288xf32>
    %20 = math.roundeven %19 : vector<8x288xf32>
    %cst_9 = arith.constant -1.280000e+02 : f32
    %cst_10 = arith.constant 1.270000e+02 : f32
    %21 = vector.broadcast %cst_9 : f32 to vector<8x288xf32>
    %22 = arith.maximumf %21, %20 : vector<8x288xf32>
    %23 = vector.broadcast %cst_10 : f32 to vector<8x288xf32>
    %24 = arith.minimumf %23, %22 : vector<8x288xf32>
    %25 = arith.truncf %24 : vector<8x288xf32> to vector<8x288xbf16>
    %26 = vector.extract_strided_slice %25 {offsets = [0, 0], sizes = [8, 8], strides = [1, 1]} : vector<8x288xbf16> to vector<8x8xbf16>
    %27 = vector.extract_strided_slice %25 {offsets = [0, 96], sizes = [8, 8], strides = [1, 1]} : vector<8x288xbf16> to vector<8x8xbf16>
    %28 = vector.extract_strided_slice %25 {offsets = [0, 192], sizes = [8, 8], strides = [1, 1]} : vector<8x288xbf16> to vector<8x8xbf16>
    %cst_11 = arith.constant dense<0.000000e+00> : vector<8x8xf32>
    %29 = tpu.matmul %26, %27, %cst_11 {dimension_numbers = #tpu.dot_dimension_numbers<[1], [1], [0], [0], [0, 0, 1, 0], [], []>} : vector<8x8xbf16>, vector<8x8xbf16>, vector<8x8xf32> -> vector<8x8xf32>
    %cst_12 = arith.constant 0.00707106758 : f32
    %30 = vector.broadcast %cst_12 : f32 to vector<8x8xf32>
    %31 = arith.mulf %29, %30 : vector<8x8xf32>
    %32 = math.roundeven %31 : vector<8x8xf32>
    %cst_13 = arith.constant -1.280000e+02 : f32
    %cst_14 = arith.constant 1.270000e+02 : f32
    %33 = vector.broadcast %cst_13 : f32 to vector<8x8xf32>
    %34 = arith.maximumf %33, %32 : vector<8x8xf32>
    %35 = vector.broadcast %cst_14 : f32 to vector<8x8xf32>
    %36 = arith.minimumf %35, %34 : vector<8x8xf32>
    %cst_15 = arith.constant 2.000000e-02 : f32
    %37 = vector.broadcast %cst_15 : f32 to vector<8x8xf32>
    %38 = arith.mulf %36, %37 : vector<8x8xf32>
    %cst_16 = arith.constant dense<0xFF800000> : vector<8xf32>
    %39 = vector.multi_reduction <maximumf>, %38, %cst_16 [1] : vector<8x8xf32> to vector<8xf32>
    %40 = vector.shape_cast %39 : vector<8xf32> to vector<8x1xf32>
    %41 = vector.broadcast %40 : vector<8x1xf32> to vector<8x8xf32>
    %42 = arith.subf %38, %41 : vector<8x8xf32>
    %43 = math.exp %42 : vector<8x8xf32>
    %cst_17 = arith.constant dense<0.000000e+00> : vector<8xf32>
    %44 = vector.multi_reduction <add>, %43, %cst_17 [1] : vector<8x8xf32> to vector<8xf32>
    %45 = vector.shape_cast %44 : vector<8xf32> to vector<8x1xf32>
    %46 = tpu.reciprocal %45 {approx = true} : vector<8x1xf32> -> vector<8x1xf32>
    %47 = vector.broadcast %46 : vector<8x1xf32> to vector<8x8xf32>
    %48 = arith.mulf %43, %47 : vector<8x8xf32>
    %cst_18 = arith.constant 3.276700e+04 : f32
    %49 = vector.broadcast %cst_18 : f32 to vector<8x8xf32>
    %50 = arith.mulf %48, %49 : vector<8x8xf32>
    %51 = math.roundeven %50 : vector<8x8xf32>
    %cst_19 = arith.constant 0.000000e+00 : f32
    %cst_20 = arith.constant 3.276700e+04 : f32
    %52 = vector.broadcast %cst_19 : f32 to vector<8x8xf32>
    %53 = arith.maximumf %52, %51 : vector<8x8xf32>
    %54 = vector.broadcast %cst_20 : f32 to vector<8x8xf32>
    %55 = arith.minimumf %54, %53 : vector<8x8xf32>
    %cst_21 = arith.constant 0.0038758507 : f32
    %56 = vector.broadcast %cst_21 : f32 to vector<8x8xf32>
    %57 = arith.mulf %55, %56 : vector<8x8xf32>
    %58 = math.roundeven %57 : vector<8x8xf32>
    %cst_22 = arith.constant 0.000000e+00 : f32
    %cst_23 = arith.constant 1.270000e+02 : f32
    %59 = vector.broadcast %cst_22 : f32 to vector<8x8xf32>
    %60 = arith.maximumf %59, %58 : vector<8x8xf32>
    %61 = vector.broadcast %cst_23 : f32 to vector<8x8xf32>
    %62 = arith.minimumf %61, %60 : vector<8x8xf32>
    %63 = arith.truncf %62 : vector<8x8xf32> to vector<8x8xbf16>
    %cst_24 = arith.constant dense<0.000000e+00> : vector<8x8xf32>
    %64 = tpu.matmul %63, %28, %cst_24 {dimension_numbers = #tpu.dot_dimension_numbers<[1], [0], [0], [1], [0, 0, 1, 1], [], []>} : vector<8x8xbf16>, vector<8x8xbf16>, vector<8x8xf32> -> vector<8x8xf32>
    %cst_25 = arith.constant 0.0157480314 : f32
    %65 = vector.broadcast %cst_25 : f32 to vector<8x8xf32>
    %66 = arith.mulf %64, %65 : vector<8x8xf32>
    %67 = math.roundeven %66 : vector<8x8xf32>
    %cst_26 = arith.constant -1.280000e+02 : f32
    %cst_27 = arith.constant 1.270000e+02 : f32
    %68 = vector.broadcast %cst_26 : f32 to vector<8x8xf32>
    %69 = arith.maximumf %68, %67 : vector<8x8xf32>
    %70 = vector.broadcast %cst_27 : f32 to vector<8x8xf32>
    %71 = arith.minimumf %70, %69 : vector<8x8xf32>
    %c0_28 = arith.constant 0 : index
    %c0_29 = arith.constant 0 : index
    %72 = vector.load %arg8[%c0_28, %c0_29] : memref<8x96xf32, #tpu.memory_space<vmem>>, vector<8x8xf32>
    tpu.vector_store %arg8[%c0_28, %c0_29], %71 {strides = array<i32>} : memref<8x96xf32, #tpu.memory_space<vmem>>, vector<8x8xf32>,
    %73 = vector.extract_strided_slice %25 {offsets = [0, 8], sizes = [8, 8], strides = [1, 1]} : vector<8x288xbf16> to vector<8x8xbf16>
    %74 = vector.extract_strided_slice %25 {offsets = [0, 104], sizes = [8, 8], strides = [1, 1]} : vector<8x288xbf16> to vector<8x8xbf16>
    %75 = vector.extract_strided_slice %25 {offsets = [0, 200], sizes = [8, 8], strides = [1, 1]} : vector<8x288xbf16> to vector<8x8xbf16>
    %cst_30 = arith.constant dense<0.000000e+00> : vector<8x8xf32>
    %76 = tpu.matmul %73, %74, %cst_30 {dimension_numbers = #tpu.dot_dimension_numbers<[1], [1], [0], [0], [0, 0, 1, 0], [], []>} : vector<8x8xbf16>, vector<8x8xbf16>, vector<8x8xf32> -> vector<8x8xf32>
    %cst_31 = arith.constant 0.00707106758 : f32
    %77 = vector.broadcast %cst_31 : f32 to vector<8x8xf32>
    %78 = arith.mulf %76, %77 : vector<8x8xf32>
    %79 = math.roundeven %78 : vector<8x8xf32>
    %cst_32 = arith.constant -1.280000e+02 : f32
    %cst_33 = arith.constant 1.270000e+02 : f32
    %80 = vector.broadcast %cst_32 : f32 to vector<8x8xf32>
    %81 = arith.maximumf %80, %79 : vector<8x8xf32>
    %82 = vector.broadcast %cst_33 : f32 to vector<8x8xf32>
    %83 = arith.minimumf %82, %81 : vector<8x8xf32>
    %cst_34 = arith.constant 2.000000e-02 : f32
    %84 = vector.broadcast %cst_34 : f32 to vector<8x8xf32>
    %85 = arith.mulf %83, %84 : vector<8x8xf32>
    %cst_35 = arith.constant dense<0xFF800000> : vector<8xf32>
    %86 = vector.multi_reduction <maximumf>, %85, %cst_35 [1] : vector<8x8xf32> to vector<8xf32>
    %87 = vector.shape_cast %86 : vector<8xf32> to vector<8x1xf32>
    %88 = vector.broadcast %87 : vector<8x1xf32> to vector<8x8xf32>
    %89 = arith.subf %85, %88 : vector<8x8xf32>
    %90 = math.exp %89 : vector<8x8xf32>
    %cst_36 = arith.constant dense<0.000000e+00> : vector<8xf32>
    %91 = vector.multi_reduction <add>, %90, %cst_36 [1] : vector<8x8xf32> to vector<8xf32>
    %92 = vector.shape_cast %91 : vector<8xf32> to vector<8x1xf32>
    %93 = tpu.reciprocal %92 {approx = true} : vector<8x1xf32> -> vector<8x1xf32>
    %94 = vector.broadcast %93 : vector<8x1xf32> to vector<8x8xf32>
    %95 = arith.mulf %90, %94 : vector<8x8xf32>
    %cst_37 = arith.constant 3.276700e+04 : f32
    %96 = vector.broadcast %cst_37 : f32 to vector<8x8xf32>
    %97 = arith.mulf %95, %96 : vector<8x8xf32>
    %98 = math.roundeven %97 : vector<8x8xf32>
    %cst_38 = arith.constant 0.000000e+00 : f32
    %cst_39 = arith.constant 3.276700e+04 : f32
    %99 = vector.broadcast %cst_38 : f32 to vector<8x8xf32>
    %100 = arith.maximumf %99, %98 : vector<8x8xf32>
    %101 = vector.broadcast %cst_39 : f32 to vector<8x8xf32>
    %102 = arith.minimumf %101, %100 : vector<8x8xf32>
    %cst_40 = arith.constant 0.0038758507 : f32
    %103 = vector.broadcast %cst_40 : f32 to vector<8x8xf32>
    %104 = arith.mulf %102, %103 : vector<8x8xf32>
    %105 = math.roundeven %104 : vector<8x8xf32>
    %cst_41 = arith.constant 0.000000e+00 : f32
    %cst_42 = arith.constant 1.270000e+02 : f32
    %106 = vector.broadcast %cst_41 : f32 to vector<8x8xf32>
    %107 = arith.maximumf %106, %105 : vector<8x8xf32>
    %108 = vector.broadcast %cst_42 : f32 to vector<8x8xf32>
    %109 = arith.minimumf %108, %107 : vector<8x8xf32>
    %110 = arith.truncf %109 : vector<8x8xf32> to vector<8x8xbf16>
    %cst_43 = arith.constant dense<0.000000e+00> : vector<8x8xf32>
    %111 = tpu.matmul %110, %75, %cst_43 {dimension_numbers = #tpu.dot_dimension_numbers<[1], [0], [0], [1], [0, 0, 1, 1], [], []>} : vector<8x8xbf16>, vector<8x8xbf16>, vector<8x8xf32> -> vector<8x8xf32>
    %cst_44 = arith.constant 0.0157480314 : f32
    %112 = vector.broadcast %cst_44 : f32 to vector<8x8xf32>
    %113 = arith.mulf %111, %112 : vector<8x8xf32>
    %114 = math.roundeven %113 : vector<8x8xf32>
    %cst_45 = arith.constant -1.280000e+02 : f32
    %cst_46 = arith.constant 1.270000e+02 : f32
    %115 = vector.broadcast %cst_45 : f32 to vector<8x8xf32>
    %116 = arith.maximumf %115, %114 : vector<8x8xf32>
    %117 = vector.broadcast %cst_46 : f32 to vector<8x8xf32>
    %118 = arith.minimumf %117, %116 : vector<8x8xf32>
    %c0_47 = arith.constant 0 : index
    %c8 = arith.constant 8 : index
    %119 = vector.load %arg8[%c0_47, %c8] : memref<8x96xf32, #tpu.memory_space<vmem>>, vector<8x8xf32>
    tpu.vector_store %arg8[%c0_47, %c8], %118 {strides = array<i32>} : memref<8x96xf32, #tpu.memory_space<vmem>>, vector<8x8xf32>,
    %120 = vector.extract_strided_slice %25 {offsets = [0, 16], sizes = [8, 8], strides = [1, 1]} : vector<8x288xbf16> to vector<8x8xbf16>
    %121 = vector.extract_strided_slice %25 {offsets = [0, 112], sizes = [8, 8], strides = [1, 1]} : vector<8x288xbf16> to vector<8x8xbf16>
    %122 = vector.extract_strided_slice %25 {offsets = [0, 208], sizes = [8, 8], strides = [1, 1]} : vector<8x288xbf16> to vector<8x8xbf16>
    %cst_48 = arith.constant dense<0.000000e+00> : vector<8x8xf32>
    %123 = tpu.matmul %120, %121, %cst_48 {dimension_numbers = #tpu.dot_dimension_numbers<[1], [1], [0], [0], [0, 0, 1, 0], [], []>} : vector<8x8xbf16>, vector<8x8xbf16>, vector<8x8xf32> -> vector<8x8xf32>
    %cst_49 = arith.constant 0.00707106758 : f32
    %124 = vector.broadcast %cst_49 : f32 to vector<8x8xf32>
    %125 = arith.mulf %123, %124 : vector<8x8xf32>
    %126 = math.roundeven %125 : vector<8x8xf32>
    %cst_50 = arith.constant -1.280000e+02 : f32
    %cst_51 = arith.constant 1.270000e+02 : f32
    %127 = vector.broadcast %cst_50 : f32 to vector<8x8xf32>
    %128 = arith.maximumf %127, %126 : vector<8x8xf32>
    %129 = vector.broadcast %cst_51 : f32 to vector<8x8xf32>
    %130 = arith.minimumf %129, %128 : vector<8x8xf32>
    %cst_52 = arith.constant 2.000000e-02 : f32
    %131 = vector.broadcast %cst_52 : f32 to vector<8x8xf32>
    %132 = arith.mulf %130, %131 : vector<8x8xf32>
    %cst_53 = arith.constant dense<0xFF800000> : vector<8xf32>
    %133 = vector.multi_reduction <maximumf>, %132, %cst_53 [1] : vector<8x8xf32> to vector<8xf32>
    %134 = vector.shape_cast %133 : vector<8xf32> to vector<8x1xf32>
    %135 = vector.broadcast %134 : vector<8x1xf32> to vector<8x8xf32>
    %136 = arith.subf %132, %135 : vector<8x8xf32>
    %137 = math.exp %136 : vector<8x8xf32>
    %cst_54 = arith.constant dense<0.000000e+00> : vector<8xf32>
    %138 = vector.multi_reduction <add>, %137, %cst_54 [1] : vector<8x8xf32> to vector<8xf32>
    %139 = vector.shape_cast %138 : vector<8xf32> to vector<8x1xf32>
    %140 = tpu.reciprocal %139 {approx = true} : vector<8x1xf32> -> vector<8x1xf32>
    %141 = vector.broadcast %140 : vector<8x1xf32> to vector<8x8xf32>
    %142 = arith.mulf %137, %141 : vector<8x8xf32>
    %cst_55 = arith.constant 3.276700e+04 : f32
    %143 = vector.broadcast %cst_55 : f32 to vector<8x8xf32>
    %144 = arith.mulf %142, %143 : vector<8x8xf32>
    %145 = math.roundeven %144 : vector<8x8xf32>
    %cst_56 = arith.constant 0.000000e+00 : f32
    %cst_57 = arith.constant 3.276700e+04 : f32
    %146 = vector.broadcast %cst_56 : f32 to vector<8x8xf32>
    %147 = arith.maximumf %146, %145 : vector<8x8xf32>
    %148 = vector.broadcast %cst_57 : f32 to vector<8x8xf32>
    %149 = arith.minimumf %148, %147 : vector<8x8xf32>
    %cst_58 = arith.constant 0.0038758507 : f32
    %150 = vector.broadcast %cst_58 : f32 to vector<8x8xf32>
    %151 = arith.mulf %149, %150 : vector<8x8xf32>
    %152 = math.roundeven %151 : vector<8x8xf32>
    %cst_59 = arith.constant 0.000000e+00 : f32
    %cst_60 = arith.constant 1.270000e+02 : f32
    %153 = vector.broadcast %cst_59 : f32 to vector<8x8xf32>
    %154 = arith.maximumf %153, %152 : vector<8x8xf32>
    %155 = vector.broadcast %cst_60 : f32 to vector<8x8xf32>
    %156 = arith.minimumf %155, %154 : vector<8x8xf32>
    %157 = arith.truncf %156 : vector<8x8xf32> to vector<8x8xbf16>
    %cst_61 = arith.constant dense<0.000000e+00> : vector<8x8xf32>
    %158 = tpu.matmul %157, %122, %cst_61 {dimension_numbers = #tpu.dot_dimension_numbers<[1], [0], [0], [1], [0, 0, 1, 1], [], []>} : vector<8x8xbf16>, vector<8x8xbf16>, vector<8x8xf32> -> vector<8x8xf32>
    %cst_62 = arith.constant 0.0157480314 : f32
    %159 = vector.broadcast %cst_62 : f32 to vector<8x8xf32>
    %160 = arith.mulf %158, %159 : vector<8x8xf32>
    %161 = math.roundeven %160 : vector<8x8xf32>
    %cst_63 = arith.constant -1.280000e+02 : f32
    %cst_64 = arith.constant 1.270000e+02 : f32
    %162 = vector.broadcast %cst_63 : f32 to vector<8x8xf32>
    %163 = arith.maximumf %162, %161 : vector<8x8xf32>
    %164 = vector.broadcast %cst_64 : f32 to vector<8x8xf32>
    %165 = arith.minimumf %164, %163 : vector<8x8xf32>
    %c0_65 = arith.constant 0 : index
    %c16 = arith.constant 16 : index
    %166 = vector.load %arg8[%c0_65, %c16] : memref<8x96xf32, #tpu.memory_space<vmem>>, vector<8x8xf32>
    tpu.vector_store %arg8[%c0_65, %c16], %165 {strides = array<i32>} : memref<8x96xf32, #tpu.memory_space<vmem>>, vector<8x8xf32>,
    %167 = vector.extract_strided_slice %25 {offsets = [0, 24], sizes = [8, 8], strides = [1, 1]} : vector<8x288xbf16> to vector<8x8xbf16>
    %168 = vector.extract_strided_slice %25 {offsets = [0, 120], sizes = [8, 8], strides = [1, 1]} : vector<8x288xbf16> to vector<8x8xbf16>
    %169 = vector.extract_strided_slice %25 {offsets = [0, 216], sizes = [8, 8], strides = [1, 1]} : vector<8x288xbf16> to vector<8x8xbf16>
    %cst_66 = arith.constant dense<0.000000e+00> : vector<8x8xf32>
    %170 = tpu.matmul %167, %168, %cst_66 {dimension_numbers = #tpu.dot_dimension_numbers<[1], [1], [0], [0], [0, 0, 1, 0], [], []>} : vector<8x8xbf16>, vector<8x8xbf16>, vector<8x8xf32> -> vector<8x8xf32>
    %cst_67 = arith.constant 0.00707106758 : f32
    %171 = vector.broadcast %cst_67 : f32 to vector<8x8xf32>
    %172 = arith.mulf %170, %171 : vector<8x8xf32>
    %173 = math.roundeven %172 : vector<8x8xf32>
    %cst_68 = arith.constant -1.280000e+02 : f32
    %cst_69 = arith.constant 1.270000e+02 : f32
    %174 = vector.broadcast %cst_68 : f32 to vector<8x8xf32>
    %175 = arith.maximumf %174, %173 : vector<8x8xf32>
    %176 = vector.broadcast %cst_69 : f32 to vector<8x8xf32>
    %177 = arith.minimumf %176, %175 : vector<8x8xf32>
    %cst_70 = arith.constant 2.000000e-02 : f32
    %178 = vector.broadcast %cst_70 : f32 to vector<8x8xf32>
    %179 = arith.mulf %177, %178 : vector<8x8xf32>
    %cst_71 = arith.constant dense<0xFF800000> : vector<8xf32>
    %180 = vector.multi_reduction <maximumf>, %179, %cst_71 [1] : vector<8x8xf32> to vector<8xf32>
    %181 = vector.shape_cast %180 : vector<8xf32> to vector<8x1xf32>
    %182 = vector.broadcast %181 : vector<8x1xf32> to vector<8x8xf32>
    %183 = arith.subf %179, %182 : vector<8x8xf32>
    %184 = math.exp %183 : vector<8x8xf32>
    %cst_72 = arith.constant dense<0.000000e+00> : vector<8xf32>
    %185 = vector.multi_reduction <add>, %184, %cst_72 [1] : vector<8x8xf32> to vector<8xf32>
    %186 = vector.shape_cast %185 : vector<8xf32> to vector<8x1xf32>
    %187 = tpu.reciprocal %186 {approx = true} : vector<8x1xf32> -> vector<8x1xf32>
    %188 = vector.broadcast %187 : vector<8x1xf32> to vector<8x8xf32>
    %189 = arith.mulf %184, %188 : vector<8x8xf32>
    %cst_73 = arith.constant 3.276700e+04 : f32
    %190 = vector.broadcast %cst_73 : f32 to vector<8x8xf32>
    %191 = arith.mulf %189, %190 : vector<8x8xf32>
    %192 = math.roundeven %191 : vector<8x8xf32>
    %cst_74 = arith.constant 0.000000e+00 : f32
    %cst_75 = arith.constant 3.276700e+04 : f32
    %193 = vector.broadcast %cst_74 : f32 to vector<8x8xf32>
    %194 = arith.maximumf %193, %192 : vector<8x8xf32>
    %195 = vector.broadcast %cst_75 : f32 to vector<8x8xf32>
    %196 = arith.minimumf %195, %194 : vector<8x8xf32>
    %cst_76 = arith.constant 0.0038758507 : f32
    %197 = vector.broadcast %cst_76 : f32 to vector<8x8xf32>
    %198 = arith.mulf %196, %197 : vector<8x8xf32>
    %199 = math.roundeven %198 : vector<8x8xf32>
    %cst_77 = arith.constant 0.000000e+00 : f32
    %cst_78 = arith.constant 1.270000e+02 : f32
    %200 = vector.broadcast %cst_77 : f32 to vector<8x8xf32>
    %201 = arith.maximumf %200, %199 : vector<8x8xf32>
    %202 = vector.broadcast %cst_78 : f32 to vector<8x8xf32>
    %203 = arith.minimumf %202, %201 : vector<8x8xf32>
    %204 = arith.truncf %203 : vector<8x8xf32> to vector<8x8xbf16>
    %cst_79 = arith.constant dense<0.000000e+00> : vector<8x8xf32>
    %205 = tpu.matmul %204, %169, %cst_79 {dimension_numbers = #tpu.dot_dimension_numbers<[1], [0], [0], [1], [0, 0, 1, 1], [], []>} : vector<8x8xbf16>, vector<8x8xbf16>, vector<8x8xf32> -> vector<8x8xf32>
    %cst_80 = arith.constant 0.0157480314 : f32
    %206 = vector.broadcast %cst_80 : f32 to vector<8x8xf32>
    %207 = arith.mulf %205, %206 : vector<8x8xf32>
    %208 = math.roundeven %207 : vector<8x8xf32>
    %cst_81 = arith.constant -1.280000e+02 : f32
    %cst_82 = arith.constant 1.270000e+02 : f32
    %209 = vector.broadcast %cst_81 : f32 to vector<8x8xf32>
    %210 = arith.maximumf %209, %208 : vector<8x8xf32>
    %211 = vector.broadcast %cst_82 : f32 to vector<8x8xf32>
    %212 = arith.minimumf %211, %210 : vector<8x8xf32>
    %c0_83 = arith.constant 0 : index
    %c24 = arith.constant 24 : index
    %213 = vector.load %arg8[%c0_83, %c24] : memref<8x96xf32, #tpu.memory_space<vmem>>, vector<8x8xf32>
    tpu.vector_store %arg8[%c0_83, %c24], %212 {strides = array<i32>} : memref<8x96xf32, #tpu.memory_space<vmem>>, vector<8x8xf32>,
    %214 = vector.extract_strided_slice %25 {offsets = [0, 32], sizes = [8, 8], strides = [1, 1]} : vector<8x288xbf16> to vector<8x8xbf16>
    %215 = vector.extract_strided_slice %25 {offsets = [0, 128], sizes = [8, 8], strides = [1, 1]} : vector<8x288xbf16> to vector<8x8xbf16>
    %216 = vector.extract_strided_slice %25 {offsets = [0, 224], sizes = [8, 8], strides = [1, 1]} : vector<8x288xbf16> to vector<8x8xbf16>
    %cst_84 = arith.constant dense<0.000000e+00> : vector<8x8xf32>
    %217 = tpu.matmul %214, %215, %cst_84 {dimension_numbers = #tpu.dot_dimension_numbers<[1], [1], [0], [0], [0, 0, 1, 0], [], []>} : vector<8x8xbf16>, vector<8x8xbf16>, vector<8x8xf32> -> vector<8x8xf32>
    %cst_85 = arith.constant 0.00707106758 : f32
    %218 = vector.broadcast %cst_85 : f32 to vector<8x8xf32>
    %219 = arith.mulf %217, %218 : vector<8x8xf32>
    %220 = math.roundeven %219 : vector<8x8xf32>
    %cst_86 = arith.constant -1.280000e+02 : f32
    %cst_87 = arith.constant 1.270000e+02 : f32
    %221 = vector.broadcast %cst_86 : f32 to vector<8x8xf32>
    %222 = arith.maximumf %221, %220 : vector<8x8xf32>
    %223 = vector.broadcast %cst_87 : f32 to vector<8x8xf32>
    %224 = arith.minimumf %223, %222 : vector<8x8xf32>
    %cst_88 = arith.constant 2.000000e-02 : f32
    %225 = vector.broadcast %cst_88 : f32 to vector<8x8xf32>
    %226 = arith.mulf %224, %225 : vector<8x8xf32>
    %cst_89 = arith.constant dense<0xFF800000> : vector<8xf32>
    %227 = vector.multi_reduction <maximumf>, %226, %cst_89 [1] : vector<8x8xf32> to vector<8xf32>
    %228 = vector.shape_cast %227 : vector<8xf32> to vector<8x1xf32>
    %229 = vector.broadcast %228 : vector<8x1xf32> to vector<8x8xf32>
    %230 = arith.subf %226, %229 : vector<8x8xf32>
    %231 = math.exp %230 : vector<8x8xf32>
    %cst_90 = arith.constant dense<0.000000e+00> : vector<8xf32>
    %232 = vector.multi_reduction <add>, %231, %cst_90 [1] : vector<8x8xf32> to vector<8xf32>
    %233 = vector.shape_cast %232 : vector<8xf32> to vector<8x1xf32>
    %234 = tpu.reciprocal %233 {approx = true} : vector<8x1xf32> -> vector<8x1xf32>
    %235 = vector.broadcast %234 : vector<8x1xf32> to vector<8x8xf32>
    %236 = arith.mulf %231, %235 : vector<8x8xf32>
    %cst_91 = arith.constant 3.276700e+04 : f32
    %237 = vector.broadcast %cst_91 : f32 to vector<8x8xf32>
    %238 = arith.mulf %236, %237 : vector<8x8xf32>
    %239 = math.roundeven %238 : vector<8x8xf32>
    %cst_92 = arith.constant 0.000000e+00 : f32
    %cst_93 = arith.constant 3.276700e+04 : f32
    %240 = vector.broadcast %cst_92 : f32 to vector<8x8xf32>
    %241 = arith.maximumf %240, %239 : vector<8x8xf32>
    %242 = vector.broadcast %cst_93 : f32 to vector<8x8xf32>
    %243 = arith.minimumf %242, %241 : vector<8x8xf32>
    %cst_94 = arith.constant 0.0038758507 : f32
    %244 = vector.broadcast %cst_94 : f32 to vector<8x8xf32>
    %245 = arith.mulf %243, %244 : vector<8x8xf32>
    %246 = math.roundeven %245 : vector<8x8xf32>
    %cst_95 = arith.constant 0.000000e+00 : f32
    %cst_96 = arith.constant 1.270000e+02 : f32
    %247 = vector.broadcast %cst_95 : f32 to vector<8x8xf32>
    %248 = arith.maximumf %247, %246 : vector<8x8xf32>
    %249 = vector.broadcast %cst_96 : f32 to vector<8x8xf32>
    %250 = arith.minimumf %249, %248 : vector<8x8xf32>
    %251 = arith.truncf %250 : vector<8x8xf32> to vector<8x8xbf16>
    %cst_97 = arith.constant dense<0.000000e+00> : vector<8x8xf32>
    %252 = tpu.matmul %251, %216, %cst_97 {dimension_numbers = #tpu.dot_dimension_numbers<[1], [0], [0], [1], [0, 0, 1, 1], [], []>} : vector<8x8xbf16>, vector<8x8xbf16>, vector<8x8xf32> -> vector<8x8xf32>
    %cst_98 = arith.constant 0.0157480314 : f32
    %253 = vector.broadcast %cst_98 : f32 to vector<8x8xf32>
    %254 = arith.mulf %252, %253 : vector<8x8xf32>
    %255 = math.roundeven %254 : vector<8x8xf32>
    %cst_99 = arith.constant -1.280000e+02 : f32
    %cst_100 = arith.constant 1.270000e+02 : f32
    %256 = vector.broadcast %cst_99 : f32 to vector<8x8xf32>
    %257 = arith.maximumf %256, %255 : vector<8x8xf32>
    %258 = vector.broadcast %cst_100 : f32 to vector<8x8xf32>
    %259 = arith.minimumf %258, %257 : vector<8x8xf32>
    %c0_101 = arith.constant 0 : index
    %c32 = arith.constant 32 : index
    %260 = vector.load %arg8[%c0_101, %c32] : memref<8x96xf32, #tpu.memory_space<vmem>>, vector<8x8xf32>
    tpu.vector_store %arg8[%c0_101, %c32], %259 {strides = array<i32>} : memref<8x96xf32, #tpu.memory_space<vmem>>, vector<8x8xf32>,
    %261 = vector.extract_strided_slice %25 {offsets = [0, 40], sizes = [8, 8], strides = [1, 1]} : vector<8x288xbf16> to vector<8x8xbf16>
    %262 = vector.extract_strided_slice %25 {offsets = [0, 136], sizes = [8, 8], strides = [1, 1]} : vector<8x288xbf16> to vector<8x8xbf16>
    %263 = vector.extract_strided_slice %25 {offsets = [0, 232], sizes = [8, 8], strides = [1, 1]} : vector<8x288xbf16> to vector<8x8xbf16>
    %cst_102 = arith.constant dense<0.000000e+00> : vector<8x8xf32>
    %264 = tpu.matmul %261, %262, %cst_102 {dimension_numbers = #tpu.dot_dimension_numbers<[1], [1], [0], [0], [0, 0, 1, 0], [], []>} : vector<8x8xbf16>, vector<8x8xbf16>, vector<8x8xf32> -> vector<8x8xf32>
    %cst_103 = arith.constant 0.00707106758 : f32
    %265 = vector.broadcast %cst_103 : f32 to vector<8x8xf32>
    %266 = arith.mulf %264, %265 : vector<8x8xf32>
    %267 = math.roundeven %266 : vector<8x8xf32>
    %cst_104 = arith.constant -1.280000e+02 : f32
    %cst_105 = arith.constant 1.270000e+02 : f32
    %268 = vector.broadcast %cst_104 : f32 to vector<8x8xf32>
    %269 = arith.maximumf %268, %267 : vector<8x8xf32>
    %270 = vector.broadcast %cst_105 : f32 to vector<8x8xf32>
    %271 = arith.minimumf %270, %269 : vector<8x8xf32>
    %cst_106 = arith.constant 2.000000e-02 : f32
    %272 = vector.broadcast %cst_106 : f32 to vector<8x8xf32>
    %273 = arith.mulf %271, %272 : vector<8x8xf32>
    %cst_107 = arith.constant dense<0xFF800000> : vector<8xf32>
    %274 = vector.multi_reduction <maximumf>, %273, %cst_107 [1] : vector<8x8xf32> to vector<8xf32>
    %275 = vector.shape_cast %274 : vector<8xf32> to vector<8x1xf32>
    %276 = vector.broadcast %275 : vector<8x1xf32> to vector<8x8xf32>
    %277 = arith.subf %273, %276 : vector<8x8xf32>
    %278 = math.exp %277 : vector<8x8xf32>
    %cst_108 = arith.constant dense<0.000000e+00> : vector<8xf32>
    %279 = vector.multi_reduction <add>, %278, %cst_108 [1] : vector<8x8xf32> to vector<8xf32>
    %280 = vector.shape_cast %279 : vector<8xf32> to vector<8x1xf32>
    %281 = tpu.reciprocal %280 {approx = true} : vector<8x1xf32> -> vector<8x1xf32>
    %282 = vector.broadcast %281 : vector<8x1xf32> to vector<8x8xf32>
    %283 = arith.mulf %278, %282 : vector<8x8xf32>
    %cst_109 = arith.constant 3.276700e+04 : f32
    %284 = vector.broadcast %cst_109 : f32 to vector<8x8xf32>
    %285 = arith.mulf %283, %284 : vector<8x8xf32>
    %286 = math.roundeven %285 : vector<8x8xf32>
    %cst_110 = arith.constant 0.000000e+00 : f32
    %cst_111 = arith.constant 3.276700e+04 : f32
    %287 = vector.broadcast %cst_110 : f32 to vector<8x8xf32>
    %288 = arith.maximumf %287, %286 : vector<8x8xf32>
    %289 = vector.broadcast %cst_111 : f32 to vector<8x8xf32>
    %290 = arith.minimumf %289, %288 : vector<8x8xf32>
    %cst_112 = arith.constant 0.0038758507 : f32
    %291 = vector.broadcast %cst_112 : f32 to vector<8x8xf32>
    %292 = arith.mulf %290, %291 : vector<8x8xf32>
    %293 = math.roundeven %292 : vector<8x8xf32>
    %cst_113 = arith.constant 0.000000e+00 : f32
    %cst_114 = arith.constant 1.270000e+02 : f32
    %294 = vector.broadcast %cst_113 : f32 to vector<8x8xf32>
    %295 = arith.maximumf %294, %293 : vector<8x8xf32>
    %296 = vector.broadcast %cst_114 : f32 to vector<8x8xf32>
    %297 = arith.minimumf %296, %295 : vector<8x8xf32>
    %298 = arith.truncf %297 : vector<8x8xf32> to vector<8x8xbf16>
    %cst_115 = arith.constant dense<0.000000e+00> : vector<8x8xf32>
    %299 = tpu.matmul %298, %263, %cst_115 {dimension_numbers = #tpu.dot_dimension_numbers<[1], [0], [0], [1], [0, 0, 1, 1], [], []>} : vector<8x8xbf16>, vector<8x8xbf16>, vector<8x8xf32> -> vector<8x8xf32>
    %cst_116 = arith.constant 0.0157480314 : f32
    %300 = vector.broadcast %cst_116 : f32 to vector<8x8xf32>
    %301 = arith.mulf %299, %300 : vector<8x8xf32>
    %302 = math.roundeven %301 : vector<8x8xf32>
    %cst_117 = arith.constant -1.280000e+02 : f32
    %cst_118 = arith.constant 1.270000e+02 : f32
    %303 = vector.broadcast %cst_117 : f32 to vector<8x8xf32>
    %304 = arith.maximumf %303, %302 : vector<8x8xf32>
    %305 = vector.broadcast %cst_118 : f32 to vector<8x8xf32>
    %306 = arith.minimumf %305, %304 : vector<8x8xf32>
    %c0_119 = arith.constant 0 : index
    %c40 = arith.constant 40 : index
    %307 = vector.load %arg8[%c0_119, %c40] : memref<8x96xf32, #tpu.memory_space<vmem>>, vector<8x8xf32>
    tpu.vector_store %arg8[%c0_119, %c40], %306 {strides = array<i32>} : memref<8x96xf32, #tpu.memory_space<vmem>>, vector<8x8xf32>,
    %308 = vector.extract_strided_slice %25 {offsets = [0, 48], sizes = [8, 8], strides = [1, 1]} : vector<8x288xbf16> to vector<8x8xbf16>
    %309 = vector.extract_strided_slice %25 {offsets = [0, 144], sizes = [8, 8], strides = [1, 1]} : vector<8x288xbf16> to vector<8x8xbf16>
    %310 = vector.extract_strided_slice %25 {offsets = [0, 240], sizes = [8, 8], strides = [1, 1]} : vector<8x288xbf16> to vector<8x8xbf16>
    %cst_120 = arith.constant dense<0.000000e+00> : vector<8x8xf32>
    %311 = tpu.matmul %308, %309, %cst_120 {dimension_numbers = #tpu.dot_dimension_numbers<[1], [1], [0], [0], [0, 0, 1, 0], [], []>} : vector<8x8xbf16>, vector<8x8xbf16>, vector<8x8xf32> -> vector<8x8xf32>
    %cst_121 = arith.constant 0.00707106758 : f32
    %312 = vector.broadcast %cst_121 : f32 to vector<8x8xf32>
    %313 = arith.mulf %311, %312 : vector<8x8xf32>
    %314 = math.roundeven %313 : vector<8x8xf32>
    %cst_122 = arith.constant -1.280000e+02 : f32
    %cst_123 = arith.constant 1.270000e+02 : f32
    %315 = vector.broadcast %cst_122 : f32 to vector<8x8xf32>
    %316 = arith.maximumf %315, %314 : vector<8x8xf32>
    %317 = vector.broadcast %cst_123 : f32 to vector<8x8xf32>
    %318 = arith.minimumf %317, %316 : vector<8x8xf32>
    %cst_124 = arith.constant 2.000000e-02 : f32
    %319 = vector.broadcast %cst_124 : f32 to vector<8x8xf32>
    %320 = arith.mulf %318, %319 : vector<8x8xf32>
    %cst_125 = arith.constant dense<0xFF800000> : vector<8xf32>
    %321 = vector.multi_reduction <maximumf>, %320, %cst_125 [1] : vector<8x8xf32> to vector<8xf32>
    %322 = vector.shape_cast %321 : vector<8xf32> to vector<8x1xf32>
    %323 = vector.broadcast %322 : vector<8x1xf32> to vector<8x8xf32>
    %324 = arith.subf %320, %323 : vector<8x8xf32>
    %325 = math.exp %324 : vector<8x8xf32>
    %cst_126 = arith.constant dense<0.000000e+00> : vector<8xf32>
    %326 = vector.multi_reduction <add>, %325, %cst_126 [1] : vector<8x8xf32> to vector<8xf32>
    %327 = vector.shape_cast %326 : vector<8xf32> to vector<8x1xf32>
    %328 = tpu.reciprocal %327 {approx = true} : vector<8x1xf32> -> vector<8x1xf32>
    %329 = vector.broadcast %328 : vector<8x1xf32> to vector<8x8xf32>
    %330 = arith.mulf %325, %329 : vector<8x8xf32>
    %cst_127 = arith.constant 3.276700e+04 : f32
    %331 = vector.broadcast %cst_127 : f32 to vector<8x8xf32>
    %332 = arith.mulf %330, %331 : vector<8x8xf32>
    %333 = math.roundeven %332 : vector<8x8xf32>
    %cst_128 = arith.constant 0.000000e+00 : f32
    %cst_129 = arith.constant 3.276700e+04 : f32
    %334 = vector.broadcast %cst_128 : f32 to vector<8x8xf32>
    %335 = arith.maximumf %334, %333 : vector<8x8xf32>
    %336 = vector.broadcast %cst_129 : f32 to vector<8x8xf32>
    %337 = arith.minimumf %336, %335 : vector<8x8xf32>
    %cst_130 = arith.constant 0.0038758507 : f32
    %338 = vector.broadcast %cst_130 : f32 to vector<8x8xf32>
    %339 = arith.mulf %337, %338 : vector<8x8xf32>
    %340 = math.roundeven %339 : vector<8x8xf32>
    %cst_131 = arith.constant 0.000000e+00 : f32
    %cst_132 = arith.constant 1.270000e+02 : f32
    %341 = vector.broadcast %cst_131 : f32 to vector<8x8xf32>
    %342 = arith.maximumf %341, %340 : vector<8x8xf32>
    %343 = vector.broadcast %cst_132 : f32 to vector<8x8xf32>
    %344 = arith.minimumf %343, %342 : vector<8x8xf32>
    %345 = arith.truncf %344 : vector<8x8xf32> to vector<8x8xbf16>
    %cst_133 = arith.constant dense<0.000000e+00> : vector<8x8xf32>
    %346 = tpu.matmul %345, %310, %cst_133 {dimension_numbers = #tpu.dot_dimension_numbers<[1], [0], [0], [1], [0, 0, 1, 1], [], []>} : vector<8x8xbf16>, vector<8x8xbf16>, vector<8x8xf32> -> vector<8x8xf32>
    %cst_134 = arith.constant 0.0157480314 : f32
    %347 = vector.broadcast %cst_134 : f32 to vector<8x8xf32>
    %348 = arith.mulf %346, %347 : vector<8x8xf32>
    %349 = math.roundeven %348 : vector<8x8xf32>
    %cst_135 = arith.constant -1.280000e+02 : f32
    %cst_136 = arith.constant 1.270000e+02 : f32
    %350 = vector.broadcast %cst_135 : f32 to vector<8x8xf32>
    %351 = arith.maximumf %350, %349 : vector<8x8xf32>
    %352 = vector.broadcast %cst_136 : f32 to vector<8x8xf32>
    %353 = arith.minimumf %352, %351 : vector<8x8xf32>
    %c0_137 = arith.constant 0 : index
    %c48 = arith.constant 48 : index
    %354 = vector.load %arg8[%c0_137, %c48] : memref<8x96xf32, #tpu.memory_space<vmem>>, vector<8x8xf32>
    tpu.vector_store %arg8[%c0_137, %c48], %353 {strides = array<i32>} : memref<8x96xf32, #tpu.memory_space<vmem>>, vector<8x8xf32>,
    %355 = vector.extract_strided_slice %25 {offsets = [0, 56], sizes = [8, 8], strides = [1, 1]} : vector<8x288xbf16> to vector<8x8xbf16>
    %356 = vector.extract_strided_slice %25 {offsets = [0, 152], sizes = [8, 8], strides = [1, 1]} : vector<8x288xbf16> to vector<8x8xbf16>
    %357 = vector.extract_strided_slice %25 {offsets = [0, 248], sizes = [8, 8], strides = [1, 1]} : vector<8x288xbf16> to vector<8x8xbf16>
    %cst_138 = arith.constant dense<0.000000e+00> : vector<8x8xf32>
    %358 = tpu.matmul %355, %356, %cst_138 {dimension_numbers = #tpu.dot_dimension_numbers<[1], [1], [0], [0], [0, 0, 1, 0], [], []>} : vector<8x8xbf16>, vector<8x8xbf16>, vector<8x8xf32> -> vector<8x8xf32>
    %cst_139 = arith.constant 0.00707106758 : f32
    %359 = vector.broadcast %cst_139 : f32 to vector<8x8xf32>
    %360 = arith.mulf %358, %359 : vector<8x8xf32>
    %361 = math.roundeven %360 : vector<8x8xf32>
    %cst_140 = arith.constant -1.280000e+02 : f32
    %cst_141 = arith.constant 1.270000e+02 : f32
    %362 = vector.broadcast %cst_140 : f32 to vector<8x8xf32>
    %363 = arith.maximumf %362, %361 : vector<8x8xf32>
    %364 = vector.broadcast %cst_141 : f32 to vector<8x8xf32>
    %365 = arith.minimumf %364, %363 : vector<8x8xf32>
    %cst_142 = arith.constant 2.000000e-02 : f32
    %366 = vector.broadcast %cst_142 : f32 to vector<8x8xf32>
    %367 = arith.mulf %365, %366 : vector<8x8xf32>
    %cst_143 = arith.constant dense<0xFF800000> : vector<8xf32>
    %368 = vector.multi_reduction <maximumf>, %367, %cst_143 [1] : vector<8x8xf32> to vector<8xf32>
    %369 = vector.shape_cast %368 : vector<8xf32> to vector<8x1xf32>
    %370 = vector.broadcast %369 : vector<8x1xf32> to vector<8x8xf32>
    %371 = arith.subf %367, %370 : vector<8x8xf32>
    %372 = math.exp %371 : vector<8x8xf32>
    %cst_144 = arith.constant dense<0.000000e+00> : vector<8xf32>
    %373 = vector.multi_reduction <add>, %372, %cst_144 [1] : vector<8x8xf32> to vector<8xf32>
    %374 = vector.shape_cast %373 : vector<8xf32> to vector<8x1xf32>
    %375 = tpu.reciprocal %374 {approx = true} : vector<8x1xf32> -> vector<8x1xf32>
    %376 = vector.broadcast %375 : vector<8x1xf32> to vector<8x8xf32>
    %377 = arith.mulf %372, %376 : vector<8x8xf32>
    %cst_145 = arith.constant 3.276700e+04 : f32
    %378 = vector.broadcast %cst_145 : f32 to vector<8x8xf32>
    %379 = arith.mulf %377, %378 : vector<8x8xf32>
    %380 = math.roundeven %379 : vector<8x8xf32>
    %cst_146 = arith.constant 0.000000e+00 : f32
    %cst_147 = arith.constant 3.276700e+04 : f32
    %381 = vector.broadcast %cst_146 : f32 to vector<8x8xf32>
    %382 = arith.maximumf %381, %380 : vector<8x8xf32>
    %383 = vector.broadcast %cst_147 : f32 to vector<8x8xf32>
    %384 = arith.minimumf %383, %382 : vector<8x8xf32>
    %cst_148 = arith.constant 0.0038758507 : f32
    %385 = vector.broadcast %cst_148 : f32 to vector<8x8xf32>
    %386 = arith.mulf %384, %385 : vector<8x8xf32>
    %387 = math.roundeven %386 : vector<8x8xf32>
    %cst_149 = arith.constant 0.000000e+00 : f32
    %cst_150 = arith.constant 1.270000e+02 : f32
    %388 = vector.broadcast %cst_149 : f32 to vector<8x8xf32>
    %389 = arith.maximumf %388, %387 : vector<8x8xf32>
    %390 = vector.broadcast %cst_150 : f32 to vector<8x8xf32>
    %391 = arith.minimumf %390, %389 : vector<8x8xf32>
    %392 = arith.truncf %391 : vector<8x8xf32> to vector<8x8xbf16>
    %cst_151 = arith.constant dense<0.000000e+00> : vector<8x8xf32>
    %393 = tpu.matmul %392, %357, %cst_151 {dimension_numbers = #tpu.dot_dimension_numbers<[1], [0], [0], [1], [0, 0, 1, 1], [], []>} : vector<8x8xbf16>, vector<8x8xbf16>, vector<8x8xf32> -> vector<8x8xf32>
    %cst_152 = arith.constant 0.0157480314 : f32
    %394 = vector.broadcast %cst_152 : f32 to vector<8x8xf32>
    %395 = arith.mulf %393, %394 : vector<8x8xf32>
    %396 = math.roundeven %395 : vector<8x8xf32>
    %cst_153 = arith.constant -1.280000e+02 : f32
    %cst_154 = arith.constant 1.270000e+02 : f32
    %397 = vector.broadcast %cst_153 : f32 to vector<8x8xf32>
    %398 = arith.maximumf %397, %396 : vector<8x8xf32>
    %399 = vector.broadcast %cst_154 : f32 to vector<8x8xf32>
    %400 = arith.minimumf %399, %398 : vector<8x8xf32>
    %c0_155 = arith.constant 0 : index
    %c56 = arith.constant 56 : index
    %401 = vector.load %arg8[%c0_155, %c56] : memref<8x96xf32, #tpu.memory_space<vmem>>, vector<8x8xf32>
    tpu.vector_store %arg8[%c0_155, %c56], %400 {strides = array<i32>} : memref<8x96xf32, #tpu.memory_space<vmem>>, vector<8x8xf32>,
    %402 = vector.extract_strided_slice %25 {offsets = [0, 64], sizes = [8, 8], strides = [1, 1]} : vector<8x288xbf16> to vector<8x8xbf16>
    %403 = vector.extract_strided_slice %25 {offsets = [0, 160], sizes = [8, 8], strides = [1, 1]} : vector<8x288xbf16> to vector<8x8xbf16>
    %404 = vector.extract_strided_slice %25 {offsets = [0, 256], sizes = [8, 8], strides = [1, 1]} : vector<8x288xbf16> to vector<8x8xbf16>
    %cst_156 = arith.constant dense<0.000000e+00> : vector<8x8xf32>
    %405 = tpu.matmul %402, %403, %cst_156 {dimension_numbers = #tpu.dot_dimension_numbers<[1], [1], [0], [0], [0, 0, 1, 0], [], []>} : vector<8x8xbf16>, vector<8x8xbf16>, vector<8x8xf32> -> vector<8x8xf32>
    %cst_157 = arith.constant 0.00707106758 : f32
    %406 = vector.broadcast %cst_157 : f32 to vector<8x8xf32>
    %407 = arith.mulf %405, %406 : vector<8x8xf32>
    %408 = math.roundeven %407 : vector<8x8xf32>
    %cst_158 = arith.constant -1.280000e+02 : f32
    %cst_159 = arith.constant 1.270000e+02 : f32
    %409 = vector.broadcast %cst_158 : f32 to vector<8x8xf32>
    %410 = arith.maximumf %409, %408 : vector<8x8xf32>
    %411 = vector.broadcast %cst_159 : f32 to vector<8x8xf32>
    %412 = arith.minimumf %411, %410 : vector<8x8xf32>
    %cst_160 = arith.constant 2.000000e-02 : f32
    %413 = vector.broadcast %cst_160 : f32 to vector<8x8xf32>
    %414 = arith.mulf %412, %413 : vector<8x8xf32>
    %cst_161 = arith.constant dense<0xFF800000> : vector<8xf32>
    %415 = vector.multi_reduction <maximumf>, %414, %cst_161 [1] : vector<8x8xf32> to vector<8xf32>
    %416 = vector.shape_cast %415 : vector<8xf32> to vector<8x1xf32>
    %417 = vector.broadcast %416 : vector<8x1xf32> to vector<8x8xf32>
    %418 = arith.subf %414, %417 : vector<8x8xf32>
    %419 = math.exp %418 : vector<8x8xf32>
    %cst_162 = arith.constant dense<0.000000e+00> : vector<8xf32>
    %420 = vector.multi_reduction <add>, %419, %cst_162 [1] : vector<8x8xf32> to vector<8xf32>
    %421 = vector.shape_cast %420 : vector<8xf32> to vector<8x1xf32>
    %422 = tpu.reciprocal %421 {approx = true} : vector<8x1xf32> -> vector<8x1xf32>
    %423 = vector.broadcast %422 : vector<8x1xf32> to vector<8x8xf32>
    %424 = arith.mulf %419, %423 : vector<8x8xf32>
    %cst_163 = arith.constant 3.276700e+04 : f32
    %425 = vector.broadcast %cst_163 : f32 to vector<8x8xf32>
    %426 = arith.mulf %424, %425 : vector<8x8xf32>
    %427 = math.roundeven %426 : vector<8x8xf32>
    %cst_164 = arith.constant 0.000000e+00 : f32
    %cst_165 = arith.constant 3.276700e+04 : f32
    %428 = vector.broadcast %cst_164 : f32 to vector<8x8xf32>
    %429 = arith.maximumf %428, %427 : vector<8x8xf32>
    %430 = vector.broadcast %cst_165 : f32 to vector<8x8xf32>
    %431 = arith.minimumf %430, %429 : vector<8x8xf32>
    %cst_166 = arith.constant 0.0038758507 : f32
    %432 = vector.broadcast %cst_166 : f32 to vector<8x8xf32>
    %433 = arith.mulf %431, %432 : vector<8x8xf32>
    %434 = math.roundeven %433 : vector<8x8xf32>
    %cst_167 = arith.constant 0.000000e+00 : f32
    %cst_168 = arith.constant 1.270000e+02 : f32
    %435 = vector.broadcast %cst_167 : f32 to vector<8x8xf32>
    %436 = arith.maximumf %435, %434 : vector<8x8xf32>
    %437 = vector.broadcast %cst_168 : f32 to vector<8x8xf32>
    %438 = arith.minimumf %437, %436 : vector<8x8xf32>
    %439 = arith.truncf %438 : vector<8x8xf32> to vector<8x8xbf16>
    %cst_169 = arith.constant dense<0.000000e+00> : vector<8x8xf32>
    %440 = tpu.matmul %439, %404, %cst_169 {dimension_numbers = #tpu.dot_dimension_numbers<[1], [0], [0], [1], [0, 0, 1, 1], [], []>} : vector<8x8xbf16>, vector<8x8xbf16>, vector<8x8xf32> -> vector<8x8xf32>
    %cst_170 = arith.constant 0.0157480314 : f32
    %441 = vector.broadcast %cst_170 : f32 to vector<8x8xf32>
    %442 = arith.mulf %440, %441 : vector<8x8xf32>
    %443 = math.roundeven %442 : vector<8x8xf32>
    %cst_171 = arith.constant -1.280000e+02 : f32
    %cst_172 = arith.constant 1.270000e+02 : f32
    %444 = vector.broadcast %cst_171 : f32 to vector<8x8xf32>
    %445 = arith.maximumf %444, %443 : vector<8x8xf32>
    %446 = vector.broadcast %cst_172 : f32 to vector<8x8xf32>
    %447 = arith.minimumf %446, %445 : vector<8x8xf32>
    %c0_173 = arith.constant 0 : index
    %c64 = arith.constant 64 : index
    %448 = vector.load %arg8[%c0_173, %c64] : memref<8x96xf32, #tpu.memory_space<vmem>>, vector<8x8xf32>
    tpu.vector_store %arg8[%c0_173, %c64], %447 {strides = array<i32>} : memref<8x96xf32, #tpu.memory_space<vmem>>, vector<8x8xf32>,
    %449 = vector.extract_strided_slice %25 {offsets = [0, 72], sizes = [8, 8], strides = [1, 1]} : vector<8x288xbf16> to vector<8x8xbf16>
    %450 = vector.extract_strided_slice %25 {offsets = [0, 168], sizes = [8, 8], strides = [1, 1]} : vector<8x288xbf16> to vector<8x8xbf16>
    %451 = vector.extract_strided_slice %25 {offsets = [0, 264], sizes = [8, 8], strides = [1, 1]} : vector<8x288xbf16> to vector<8x8xbf16>
    %cst_174 = arith.constant dense<0.000000e+00> : vector<8x8xf32>
    %452 = tpu.matmul %449, %450, %cst_174 {dimension_numbers = #tpu.dot_dimension_numbers<[1], [1], [0], [0], [0, 0, 1, 0], [], []>} : vector<8x8xbf16>, vector<8x8xbf16>, vector<8x8xf32> -> vector<8x8xf32>
    %cst_175 = arith.constant 0.00707106758 : f32
    %453 = vector.broadcast %cst_175 : f32 to vector<8x8xf32>
    %454 = arith.mulf %452, %453 : vector<8x8xf32>
    %455 = math.roundeven %454 : vector<8x8xf32>
    %cst_176 = arith.constant -1.280000e+02 : f32
    %cst_177 = arith.constant 1.270000e+02 : f32
    %456 = vector.broadcast %cst_176 : f32 to vector<8x8xf32>
    %457 = arith.maximumf %456, %455 : vector<8x8xf32>
    %458 = vector.broadcast %cst_177 : f32 to vector<8x8xf32>
    %459 = arith.minimumf %458, %457 : vector<8x8xf32>
    %cst_178 = arith.constant 2.000000e-02 : f32
    %460 = vector.broadcast %cst_178 : f32 to vector<8x8xf32>
    %461 = arith.mulf %459, %460 : vector<8x8xf32>
    %cst_179 = arith.constant dense<0xFF800000> : vector<8xf32>
    %462 = vector.multi_reduction <maximumf>, %461, %cst_179 [1] : vector<8x8xf32> to vector<8xf32>
    %463 = vector.shape_cast %462 : vector<8xf32> to vector<8x1xf32>
    %464 = vector.broadcast %463 : vector<8x1xf32> to vector<8x8xf32>
    %465 = arith.subf %461, %464 : vector<8x8xf32>
    %466 = math.exp %465 : vector<8x8xf32>
    %cst_180 = arith.constant dense<0.000000e+00> : vector<8xf32>
    %467 = vector.multi_reduction <add>, %466, %cst_180 [1] : vector<8x8xf32> to vector<8xf32>
    %468 = vector.shape_cast %467 : vector<8xf32> to vector<8x1xf32>
    %469 = tpu.reciprocal %468 {approx = true} : vector<8x1xf32> -> vector<8x1xf32>
    %470 = vector.broadcast %469 : vector<8x1xf32> to vector<8x8xf32>
    %471 = arith.mulf %466, %470 : vector<8x8xf32>
    %cst_181 = arith.constant 3.276700e+04 : f32
    %472 = vector.broadcast %cst_181 : f32 to vector<8x8xf32>
    %473 = arith.mulf %471, %472 : vector<8x8xf32>
    %474 = math.roundeven %473 : vector<8x8xf32>
    %cst_182 = arith.constant 0.000000e+00 : f32
    %cst_183 = arith.constant 3.276700e+04 : f32
    %475 = vector.broadcast %cst_182 : f32 to vector<8x8xf32>
    %476 = arith.maximumf %475, %474 : vector<8x8xf32>
    %477 = vector.broadcast %cst_183 : f32 to vector<8x8xf32>
    %478 = arith.minimumf %477, %476 : vector<8x8xf32>
    %cst_184 = arith.constant 0.0038758507 : f32
    %479 = vector.broadcast %cst_184 : f32 to vector<8x8xf32>
    %480 = arith.mulf %478, %479 : vector<8x8xf32>
    %481 = math.roundeven %480 : vector<8x8xf32>
    %cst_185 = arith.constant 0.000000e+00 : f32
    %cst_186 = arith.constant 1.270000e+02 : f32
    %482 = vector.broadcast %cst_185 : f32 to vector<8x8xf32>
    %483 = arith.maximumf %482, %481 : vector<8x8xf32>
    %484 = vector.broadcast %cst_186 : f32 to vector<8x8xf32>
    %485 = arith.minimumf %484, %483 : vector<8x8xf32>
    %486 = arith.truncf %485 : vector<8x8xf32> to vector<8x8xbf16>
    %cst_187 = arith.constant dense<0.000000e+00> : vector<8x8xf32>
    %487 = tpu.matmul %486, %451, %cst_187 {dimension_numbers = #tpu.dot_dimension_numbers<[1], [0], [0], [1], [0, 0, 1, 1], [], []>} : vector<8x8xbf16>, vector<8x8xbf16>, vector<8x8xf32> -> vector<8x8xf32>
    %cst_188 = arith.constant 0.0157480314 : f32
    %488 = vector.broadcast %cst_188 : f32 to vector<8x8xf32>
    %489 = arith.mulf %487, %488 : vector<8x8xf32>
    %490 = math.roundeven %489 : vector<8x8xf32>
    %cst_189 = arith.constant -1.280000e+02 : f32
    %cst_190 = arith.constant 1.270000e+02 : f32
    %491 = vector.broadcast %cst_189 : f32 to vector<8x8xf32>
    %492 = arith.maximumf %491, %490 : vector<8x8xf32>
    %493 = vector.broadcast %cst_190 : f32 to vector<8x8xf32>
    %494 = arith.minimumf %493, %492 : vector<8x8xf32>
    %c0_191 = arith.constant 0 : index
    %c72 = arith.constant 72 : index
    %495 = vector.load %arg8[%c0_191, %c72] : memref<8x96xf32, #tpu.memory_space<vmem>>, vector<8x8xf32>
    tpu.vector_store %arg8[%c0_191, %c72], %494 {strides = array<i32>} : memref<8x96xf32, #tpu.memory_space<vmem>>, vector<8x8xf32>,
    %496 = vector.extract_strided_slice %25 {offsets = [0, 80], sizes = [8, 8], strides = [1, 1]} : vector<8x288xbf16> to vector<8x8xbf16>
    %497 = vector.extract_strided_slice %25 {offsets = [0, 176], sizes = [8, 8], strides = [1, 1]} : vector<8x288xbf16> to vector<8x8xbf16>
    %498 = vector.extract_strided_slice %25 {offsets = [0, 272], sizes = [8, 8], strides = [1, 1]} : vector<8x288xbf16> to vector<8x8xbf16>
    %cst_192 = arith.constant dense<0.000000e+00> : vector<8x8xf32>
    %499 = tpu.matmul %496, %497, %cst_192 {dimension_numbers = #tpu.dot_dimension_numbers<[1], [1], [0], [0], [0, 0, 1, 0], [], []>} : vector<8x8xbf16>, vector<8x8xbf16>, vector<8x8xf32> -> vector<8x8xf32>
    %cst_193 = arith.constant 0.00707106758 : f32
    %500 = vector.broadcast %cst_193 : f32 to vector<8x8xf32>
    %501 = arith.mulf %499, %500 : vector<8x8xf32>
    %502 = math.roundeven %501 : vector<8x8xf32>
    %cst_194 = arith.constant -1.280000e+02 : f32
    %cst_195 = arith.constant 1.270000e+02 : f32
    %503 = vector.broadcast %cst_194 : f32 to vector<8x8xf32>
    %504 = arith.maximumf %503, %502 : vector<8x8xf32>
    %505 = vector.broadcast %cst_195 : f32 to vector<8x8xf32>
    %506 = arith.minimumf %505, %504 : vector<8x8xf32>
    %cst_196 = arith.constant 2.000000e-02 : f32
    %507 = vector.broadcast %cst_196 : f32 to vector<8x8xf32>
    %508 = arith.mulf %506, %507 : vector<8x8xf32>
    %cst_197 = arith.constant dense<0xFF800000> : vector<8xf32>
    %509 = vector.multi_reduction <maximumf>, %508, %cst_197 [1] : vector<8x8xf32> to vector<8xf32>
    %510 = vector.shape_cast %509 : vector<8xf32> to vector<8x1xf32>
    %511 = vector.broadcast %510 : vector<8x1xf32> to vector<8x8xf32>
    %512 = arith.subf %508, %511 : vector<8x8xf32>
    %513 = math.exp %512 : vector<8x8xf32>
    %cst_198 = arith.constant dense<0.000000e+00> : vector<8xf32>
    %514 = vector.multi_reduction <add>, %513, %cst_198 [1] : vector<8x8xf32> to vector<8xf32>
    %515 = vector.shape_cast %514 : vector<8xf32> to vector<8x1xf32>
    %516 = tpu.reciprocal %515 {approx = true} : vector<8x1xf32> -> vector<8x1xf32>
    %517 = vector.broadcast %516 : vector<8x1xf32> to vector<8x8xf32>
    %518 = arith.mulf %513, %517 : vector<8x8xf32>
    %cst_199 = arith.constant 3.276700e+04 : f32
    %519 = vector.broadcast %cst_199 : f32 to vector<8x8xf32>
    %520 = arith.mulf %518, %519 : vector<8x8xf32>
    %521 = math.roundeven %520 : vector<8x8xf32>
    %cst_200 = arith.constant 0.000000e+00 : f32
    %cst_201 = arith.constant 3.276700e+04 : f32
    %522 = vector.broadcast %cst_200 : f32 to vector<8x8xf32>
    %523 = arith.maximumf %522, %521 : vector<8x8xf32>
    %524 = vector.broadcast %cst_201 : f32 to vector<8x8xf32>
    %525 = arith.minimumf %524, %523 : vector<8x8xf32>
    %cst_202 = arith.constant 0.0038758507 : f32
    %526 = vector.broadcast %cst_202 : f32 to vector<8x8xf32>
    %527 = arith.mulf %525, %526 : vector<8x8xf32>
    %528 = math.roundeven %527 : vector<8x8xf32>
    %cst_203 = arith.constant 0.000000e+00 : f32
    %cst_204 = arith.constant 1.270000e+02 : f32
    %529 = vector.broadcast %cst_203 : f32 to vector<8x8xf32>
    %530 = arith.maximumf %529, %528 : vector<8x8xf32>
    %531 = vector.broadcast %cst_204 : f32 to vector<8x8xf32>
    %532 = arith.minimumf %531, %530 : vector<8x8xf32>
    %533 = arith.truncf %532 : vector<8x8xf32> to vector<8x8xbf16>
    %cst_205 = arith.constant dense<0.000000e+00> : vector<8x8xf32>
    %534 = tpu.matmul %533, %498, %cst_205 {dimension_numbers = #tpu.dot_dimension_numbers<[1], [0], [0], [1], [0, 0, 1, 1], [], []>} : vector<8x8xbf16>, vector<8x8xbf16>, vector<8x8xf32> -> vector<8x8xf32>
    %cst_206 = arith.constant 0.0157480314 : f32
    %535 = vector.broadcast %cst_206 : f32 to vector<8x8xf32>
    %536 = arith.mulf %534, %535 : vector<8x8xf32>
    %537 = math.roundeven %536 : vector<8x8xf32>
    %cst_207 = arith.constant -1.280000e+02 : f32
    %cst_208 = arith.constant 1.270000e+02 : f32
    %538 = vector.broadcast %cst_207 : f32 to vector<8x8xf32>
    %539 = arith.maximumf %538, %537 : vector<8x8xf32>
    %540 = vector.broadcast %cst_208 : f32 to vector<8x8xf32>
    %541 = arith.minimumf %540, %539 : vector<8x8xf32>
    %c0_209 = arith.constant 0 : index
    %c80 = arith.constant 80 : index
    %542 = vector.load %arg8[%c0_209, %c80] : memref<8x96xf32, #tpu.memory_space<vmem>>, vector<8x8xf32>
    tpu.vector_store %arg8[%c0_209, %c80], %541 {strides = array<i32>} : memref<8x96xf32, #tpu.memory_space<vmem>>, vector<8x8xf32>,
    %543 = vector.extract_strided_slice %25 {offsets = [0, 88], sizes = [8, 8], strides = [1, 1]} : vector<8x288xbf16> to vector<8x8xbf16>
    %544 = vector.extract_strided_slice %25 {offsets = [0, 184], sizes = [8, 8], strides = [1, 1]} : vector<8x288xbf16> to vector<8x8xbf16>
    %545 = vector.extract_strided_slice %25 {offsets = [0, 280], sizes = [8, 8], strides = [1, 1]} : vector<8x288xbf16> to vector<8x8xbf16>
    %cst_210 = arith.constant dense<0.000000e+00> : vector<8x8xf32>
    %546 = tpu.matmul %543, %544, %cst_210 {dimension_numbers = #tpu.dot_dimension_numbers<[1], [1], [0], [0], [0, 0, 1, 0], [], []>} : vector<8x8xbf16>, vector<8x8xbf16>, vector<8x8xf32> -> vector<8x8xf32>
    %cst_211 = arith.constant 0.00707106758 : f32
    %547 = vector.broadcast %cst_211 : f32 to vector<8x8xf32>
    %548 = arith.mulf %546, %547 : vector<8x8xf32>
    %549 = math.roundeven %548 : vector<8x8xf32>
    %cst_212 = arith.constant -1.280000e+02 : f32
    %cst_213 = arith.constant 1.270000e+02 : f32
    %550 = vector.broadcast %cst_212 : f32 to vector<8x8xf32>
    %551 = arith.maximumf %550, %549 : vector<8x8xf32>
    %552 = vector.broadcast %cst_213 : f32 to vector<8x8xf32>
    %553 = arith.minimumf %552, %551 : vector<8x8xf32>
    %cst_214 = arith.constant 2.000000e-02 : f32
    %554 = vector.broadcast %cst_214 : f32 to vector<8x8xf32>
    %555 = arith.mulf %553, %554 : vector<8x8xf32>
    %cst_215 = arith.constant dense<0xFF800000> : vector<8xf32>
    %556 = vector.multi_reduction <maximumf>, %555, %cst_215 [1] : vector<8x8xf32> to vector<8xf32>
    %557 = vector.shape_cast %556 : vector<8xf32> to vector<8x1xf32>
    %558 = vector.broadcast %557 : vector<8x1xf32> to vector<8x8xf32>
    %559 = arith.subf %555, %558 : vector<8x8xf32>
    %560 = math.exp %559 : vector<8x8xf32>
    %cst_216 = arith.constant dense<0.000000e+00> : vector<8xf32>
    %561 = vector.multi_reduction <add>, %560, %cst_216 [1] : vector<8x8xf32> to vector<8xf32>
    %562 = vector.shape_cast %561 : vector<8xf32> to vector<8x1xf32>
    %563 = tpu.reciprocal %562 {approx = true} : vector<8x1xf32> -> vector<8x1xf32>
    %564 = vector.broadcast %563 : vector<8x1xf32> to vector<8x8xf32>
    %565 = arith.mulf %560, %564 : vector<8x8xf32>
    %cst_217 = arith.constant 3.276700e+04 : f32
    %566 = vector.broadcast %cst_217 : f32 to vector<8x8xf32>
    %567 = arith.mulf %565, %566 : vector<8x8xf32>
    %568 = math.roundeven %567 : vector<8x8xf32>
    %cst_218 = arith.constant 0.000000e+00 : f32
    %cst_219 = arith.constant 3.276700e+04 : f32
    %569 = vector.broadcast %cst_218 : f32 to vector<8x8xf32>
    %570 = arith.maximumf %569, %568 : vector<8x8xf32>
    %571 = vector.broadcast %cst_219 : f32 to vector<8x8xf32>
    %572 = arith.minimumf %571, %570 : vector<8x8xf32>
    %cst_220 = arith.constant 0.0038758507 : f32
    %573 = vector.broadcast %cst_220 : f32 to vector<8x8xf32>
    %574 = arith.mulf %572, %573 : vector<8x8xf32>
    %575 = math.roundeven %574 : vector<8x8xf32>
    %cst_221 = arith.constant 0.000000e+00 : f32
    %cst_222 = arith.constant 1.270000e+02 : f32
    %576 = vector.broadcast %cst_221 : f32 to vector<8x8xf32>
    %577 = arith.maximumf %576, %575 : vector<8x8xf32>
    %578 = vector.broadcast %cst_222 : f32 to vector<8x8xf32>
    %579 = arith.minimumf %578, %577 : vector<8x8xf32>
    %580 = arith.truncf %579 : vector<8x8xf32> to vector<8x8xbf16>
    %cst_223 = arith.constant dense<0.000000e+00> : vector<8x8xf32>
    %581 = tpu.matmul %580, %545, %cst_223 {dimension_numbers = #tpu.dot_dimension_numbers<[1], [0], [0], [1], [0, 0, 1, 1], [], []>} : vector<8x8xbf16>, vector<8x8xbf16>, vector<8x8xf32> -> vector<8x8xf32>
    %cst_224 = arith.constant 0.0157480314 : f32
    %582 = vector.broadcast %cst_224 : f32 to vector<8x8xf32>
    %583 = arith.mulf %581, %582 : vector<8x8xf32>
    %584 = math.roundeven %583 : vector<8x8xf32>
    %cst_225 = arith.constant -1.280000e+02 : f32
    %cst_226 = arith.constant 1.270000e+02 : f32
    %585 = vector.broadcast %cst_225 : f32 to vector<8x8xf32>
    %586 = arith.maximumf %585, %584 : vector<8x8xf32>
    %587 = vector.broadcast %cst_226 : f32 to vector<8x8xf32>
    %588 = arith.minimumf %587, %586 : vector<8x8xf32>
    %c0_227 = arith.constant 0 : index
    %c88 = arith.constant 88 : index
    %589 = vector.load %arg8[%c0_227, %c88] : memref<8x96xf32, #tpu.memory_space<vmem>>, vector<8x8xf32>
    tpu.vector_store %arg8[%c0_227, %c88], %588 {strides = array<i32>} : memref<8x96xf32, #tpu.memory_space<vmem>>, vector<8x8xf32>,
    %c0_228 = arith.constant 0 : index
    %c0_229 = arith.constant 0 : index
    %590 = vector.load %arg8[%c0_228, %c0_229] : memref<8x96xf32, #tpu.memory_space<vmem>>, vector<8x96xf32>
    %591 = arith.truncf %590 : vector<8x96xf32> to vector<8x96xbf16>
    %c0_230 = arith.constant 0 : index
    %c0_231 = arith.constant 0 : index
    %592 = vector.load %arg5[%c0_230, %c0_231] : memref<96x96xbf16, #tpu.memory_space<vmem>>, vector<96x96xbf16>
    %cst_232 = arith.constant dense<0.000000e+00> : vector<8x96xf32>
    %593 = tpu.matmul %591, %592, %cst_232 {dimension_numbers = #tpu.dot_dimension_numbers<[1], [0], [0], [1], [0, 0, 1, 1], [], []>} : vector<8x96xbf16>, vector<96x96xbf16>, vector<8x96xf32> -> vector<8x96xf32>
    %c0_233 = arith.constant 0 : index
    %c0_234 = arith.constant 0 : index
    %594 = vector.load %arg6[%c0_233, %c0_234] : memref<1x96xf32, #tpu.memory_space<vmem>>, vector<1x96xf32>
    %595 = vector.broadcast %594 : vector<1x96xf32> to vector<8x96xf32>
    %596 = arith.addf %593, %595 : vector<8x96xf32>
    %597 = vector.broadcast %2 : f32 to vector<8x96xf32>
    %598 = arith.mulf %596, %597 : vector<8x96xf32>
    %599 = math.roundeven %598 : vector<8x96xf32>
    %cst_235 = arith.constant -1.280000e+02 : f32
    %cst_236 = arith.constant 1.270000e+02 : f32
    %600 = vector.broadcast %cst_235 : f32 to vector<8x96xf32>
    %601 = arith.maximumf %600, %599 : vector<8x96xf32>
    %602 = vector.broadcast %cst_236 : f32 to vector<8x96xf32>
    %603 = arith.minimumf %602, %601 : vector<8x96xf32>
    %cst_237 = arith.constant 0.00999999977 : f32
    %604 = vector.broadcast %cst_237 : f32 to vector<8x96xf32>
    %605 = arith.mulf %603, %604 : vector<8x96xf32>
    %c0_238 = arith.constant 0 : index
    %c0_239 = arith.constant 0 : index
    %c0_240 = arith.constant 0 : index
    %606 = vector.load %arg7[%c0_238, %c0_239, %c0_240] : memref<1x8x96xf32, #tpu.memory_space<vmem>>, vector<1x8x96xf32>
    %607 = vector.shape_cast %606 : vector<1x8x96xf32> to vector<8x96xf32>
    %608 = vector.shape_cast %605 : vector<8x96xf32> to vector<1x8x96xf32>
    tpu.vector_store %arg7[%c0_238, %c0_239, %c0_240], %608 {strides = array<i32>} : memref<1x8x96xf32, #tpu.memory_space<vmem>>, vector<1x8x96xf32>,
    return
  }
  func.func @transform_0(%arg0: i32) -> i32 {
    %c0_i32 = arith.constant 0 : i32
    %c0_i32_0 = arith.constant 0 : i32
    return %c0_i32 : i32
  }
  func.func @transform_1(%arg0: i32) -> (i32, i32, i32) {
    %c0_i32 = arith.constant 0 : i32
    %c0_i32_0 = arith.constant 0 : i32
    %c0_i32_1 = arith.constant 0 : i32
    return %arg0, %c0_i32, %c0_i32_0 : i32, i32, i32
  }
  func.func @transform_2(%arg0: i32) -> (i32, i32) {
    %c0_i32 = arith.constant 0 : i32
    %c0_i32_0 = arith.constant 0 : i32
    %c0_i32_1 = arith.constant 0 : i32
    return %c0_i32, %c0_i32_0 : i32, i32
  }
  func.func @transform_3(%arg0: i32) -> (i32, i32) {
    %c0_i32 = arith.constant 0 : i32
    %c0_i32_0 = arith.constant 0 : i32
    %c0_i32_1 = arith.constant 0 : i32
    return %c0_i32, %c0_i32_0 : i32, i32
  }
  func.func @transform_4(%arg0: i32) -> (i32, i32) {
    %c0_i32 = arith.constant 0 : i32
    %c0_i32_0 = arith.constant 0 : i32
    %c0_i32_1 = arith.constant 0 : i32
    return %c0_i32, %c0_i32_0 : i32, i32
  }
  func.func @transform_5(%arg0: i32) -> (i32, i32) {
    %c0_i32 = arith.constant 0 : i32
    %c0_i32_0 = arith.constant 0 : i32
    %c0_i32_1 = arith.constant 0 : i32
    return %c0_i32, %c0_i32_0 : i32, i32
  }
  func.func @transform_6(%arg0: i32) -> (i32, i32, i32) {
    %c0_i32 = arith.constant 0 : i32
    %c0_i32_0 = arith.constant 0 : i32
    %c0_i32_1 = arith.constant 0 : i32
    return %arg0, %c0_i32, %c0_i32_0 : i32, i32, i32
  }
}

</mosaic_0001>

<llo_original>
// kernel: quant_msa_forward.1
$region0: #{quant_msa_forward.1}
  #allocation0 [shape = 'u32[]', space=smem, size = 0x4, offset = 0x4, fixed_abs, tag = 'smem constant byte address 0x4 - core index']
  #allocation1 [shape = 'u32[72,128]{1,0:T(1,128)}', space=vmem, size = 0x9000, scoped, tag = 'internal scratch']
  #allocation2 [shape = 'f32[8,96]{1,0:T(8,128)}', space=vmem, size = 0x1000, scoped, tag = 'scratch operand']
  %s0 = inlined_call_operand.vmem [shape: f32[4], index: 0, kind: input, shape index: {}]
  %s1 = inlined_call_operand.vmem [shape: f32[2,8,96], index: 1, kind: input, shape index: {}]
  %s2 = inlined_call_operand.vmem [shape: bf16[96,288], index: 2, kind: input, shape index: {}]
  %s3 = inlined_call_operand.vmem [shape: f32[1,288], index: 3, kind: input, shape index: {}]
  %s4 = inlined_call_operand.vmem [shape: bf16[96,96], index: 4, kind: input, shape index: {}]
  %s5 = inlined_call_operand.vmem [shape: f32[1,96], index: 5, kind: input, shape index: {}]
  %s6 = inlined_call_operand.hbm [shape: f32[2,8,96], index: 6, kind: output, shape index: {}]
  %s7 = sld [smem:[#allocation0]]
  $region61: #{quant_msa_forward.1} parent=0
    _
  %s9 = ssub.s32 1, %s7
  %s10 = scalar_select 0, %s9, %s7
  $region1: #{quant_msa_forward.1} parent=0
    #allocation3 [shape = 'u8[512]{0}', space=smem, size = 0x200, scoped, tag = 'input window, operand 0, single buffered']
    #allocation4 [shape = 's32[2]{0}', space=sflag, size = 0x8, scoped, tag = 'scoped memory for quant_msa_forward.1']
    #allocation5 [shape = 's32[2]{0}', space=sflag, size = 0x8, scoped, tag = 'scoped memory for quant_msa_forward.1']
    #allocation6 [shape = 'u8[8192]{0}', space=vmem, size = 0x2000, scoped, tag = 'output window, operand 0']
    %11 = vsyncpa [#allocation5], 0
    %12 = vsyncpa [#allocation4], 0
    %s13 = scalar_lea.sflag [#allocation4], 1
    %14 = vsyncpa %s13, 0
    loop: start=0, step=1, limit=4
    $region2: #{quant_msa_forward.1} parent=1 // loop_pre_header
      _
    $region3: #{quant_msa_forward.1} parent=1 // loop_header
      %s16 = sphi 0, %s20
      %p17 = scmp.ge.s32.totalorder %s16, 4
      %s24 = sphi 0, %s24
      %s26 = sphi 0, %s24
      %s27 = sphi 0, %s26
      %s41 = sphi 0, %s27
      %s47 = sphi 0, %s49
      %s50 = sphi 0, %s47
      %s51 = sphi 0, %s50
      %s67 = sphi 0, %s51
      %s71 = sphi 0, %s71
      %s73 = sphi 0, %s71
      %s74 = sphi 0, %s73
      %s88 = sphi 0, %s74
      %s92 = sphi 0, %s92
      %s94 = sphi 0, %s92
      %s95 = sphi 0, %s94
      %s109 = sphi 0, %s95
      %s113 = sphi 0, %s113
      %s115 = sphi 0, %s113
      %s116 = sphi 0, %s115
      %s130 = sphi 0, %s116
      %s134 = sphi 0, %s134
      %s136 = sphi 0, %s134
      %s137 = sphi 0, %s136
      %s151 = sphi 0, %s137
      %s157 = sphi 0, %s159
      %s160 = sphi 0, %s157
      %s161 = sphi 0, %s160
      %s177 = sphi 0, %s161
    $region4: #{quant_msa_forward.1} parent=1 // loop_header_branch
      %19 = sbr.rel (%p17) target = $region8
    $region5: #{quant_msa_forward.1} parent=1 // loop_body
      %s21 = ssub.s32 %s16, 1
      %s22 = ssub.s32 %s16, 2
      %s23 = sadd.s32 %s16, 1
      %s25 = sadd.s32 %s24, 1
      %p28 = scmp.eq.s32.totalorder %s16, 1
      %p29 = scmp.ne.s32.totalorder %s24, %s26
      %p30 = scmp.eq.s32.totalorder %s16, 0
      %p31 = por %p29, %p30
      %p32 = scmp.ne.s32.totalorder %s24, %s26
      %p33 = scmp.eq.s32.totalorder %s21, 1
      %p34 = por %p32, %p33
      %p35 = scmp.ne.s32.totalorder %s26, %s27
      %p36 = scmp.eq.s32.totalorder %s21, 0
      %p37 = por %p35, %p36
      %p38 = scmp.ne.s32.totalorder %s26, %s27
      %p39 = scmp.eq.s32.totalorder %s22, 1
      %p40 = por %p38, %p39
      %p42 = scmp.ne.s32.totalorder %s27, %s41
      %p43 = scmp.eq.s32.totalorder %s22, 0
      %p44 = por %p42, %p43
      %s45 = ssub.s32 %s16, %s23
      %p46 = scmp.eq.s32.totalorder %s45, 0
      %s48 = sadd.s32 %s47, 1
      %s49 = scalar_select %p46, %s47, %s48
      %p52 = pneg %p46
      %p53 = scmp.eq.s32.totalorder %s16, 1
      %p54 = por %p52, %p53
      %p55 = scmp.ne.s32.totalorder %s47, %s50
      %p56 = scmp.eq.s32.totalorder %s16, 0
      %p57 = por %p55, %p56
      %p58 = scmp.ne.s32.totalorder %s47, %s50
      %p59 = scmp.eq.s32.totalorder %s21, 1
      %p60 = por %p58, %p59
      %p61 = scmp.ne.s32.totalorder %s50, %s51
      %p62 = scmp.eq.s32.totalorder %s21, 0
      %p63 = por %p61, %p62
      %p64 = scmp.ne.s32.totalorder %s50, %s51
      %p65 = scmp.eq.s32.totalorder %s22, 1
      %p66 = por %p64, %p65
      %p68 = scmp.ne.s32.totalorder %s51, %s67
      %p69 = scmp.eq.s32.totalorder %s22, 0
      %p70 = por %p68, %p69
      %s72 = sadd.s32 %s71, 1
      %p75 = scmp.eq.s32.totalorder %s16, 1
      %p76 = scmp.ne.s32.totalorder %s71, %s73
      %p77 = scmp.eq.s32.totalorder %s16, 0
      %p78 = por %p76, %p77
      %p79 = scmp.ne.s32.totalorder %s71, %s73
      %p80 = scmp.eq.s32.totalorder %s21, 1
      %p81 = por %p79, %p80
      %p82 = scmp.ne.s32.totalorder %s73, %s74
      %p83 = scmp.eq.s32.totalorder %s21, 0
      %p84 = por %p82, %p83
      %p85 = scmp.ne.s32.totalorder %s73, %s74
      %p86 = scmp.eq.s32.totalorder %s22, 1
      %p87 = por %p85, %p86
      %p89 = scmp.ne.s32.totalorder %s74, %s88
      %p90 = scmp.eq.s32.totalorder %s22, 0
      %p91 = por %p89, %p90
      %s93 = sadd.s32 %s92, 1
      %p96 = scmp.eq.s32.totalorder %s16, 1
      %p97 = scmp.ne.s32.totalorder %s92, %s94
      %p98 = scmp.eq.s32.totalorder %s16, 0
      %p99 = por %p97, %p98
      %p100 = scmp.ne.s32.totalorder %s92, %s94
      %p101 = scmp.eq.s32.totalorder %s21, 1
      %p102 = por %p100, %p101
      %p103 = scmp.ne.s32.totalorder %s94, %s95
      %p104 = scmp.eq.s32.totalorder %s21, 0
      %p105 = por %p103, %p104
      %p106 = scmp.ne.s32.totalorder %s94, %s95
      %p107 = scmp.eq.s32.totalorder %s22, 1
      %p108 = por %p106, %p107
      %p110 = scmp.ne.s32.totalorder %s95, %s109
      %p111 = scmp.eq.s32.totalorder %s22, 0
      %p112 = por %p110, %p111
      %s114 = sadd.s32 %s113, 1
      %p117 = scmp.eq.s32.totalorder %s16, 1
      %p118 = scmp.ne.s32.totalorder %s113, %s115
      %p119 = scmp.eq.s32.totalorder %s16, 0
      %p120 = por %p118, %p119
      %p121 = scmp.ne.s32.totalorder %s113, %s115
      %p122 = scmp.eq.s32.totalorder %s21, 1
      %p123 = por %p121, %p122
      %p124 = scmp.ne.s32.totalorder %s115, %s116
      %p125 = scmp.eq.s32.totalorder %s21, 0
      %p126 = por %p124, %p125
      %p127 = scmp.ne.s32.totalorder %s115, %s116
      %p128 = scmp.eq.s32.totalorder %s22, 1
      %p129 = por %p127, %p128
      %p131 = scmp.ne.s32.totalorder %s116, %s130
      %p132 = scmp.eq.s32.totalorder %s22, 0
      %p133 = por %p131, %p132
      %s135 = sadd.s32 %s134, 1
      %p138 = scmp.eq.s32.totalorder %s16, 1
      %p139 = scmp.ne.s32.totalorder %s134, %s136
      %p140 = scmp.eq.s32.totalorder %s16, 0
      %p141 = por %p139, %p140
      %p142 = scmp.ne.s32.totalorder %s134, %s136
      %p143 = scmp.eq.s32.totalorder %s21, 1
      %p144 = por %p142, %p143
      %p145 = scmp.ne.s32.totalorder %s136, %s137
      %p146 = scmp.eq.s32.totalorder %s21, 0
      %p147 = por %p145, %p146
      %p148 = scmp.ne.s32.totalorder %s136, %s137
      %p149 = scmp.eq.s32.totalorder %s22, 1
      %p150 = por %p148, %p149
      %p152 = scmp.ne.s32.totalorder %s137, %s151
      %p153 = scmp.eq.s32.totalorder %s22, 0
      %p154 = por %p152, %p153
      %s155 = ssub.s32 %s16, %s23
      %p156 = scmp.eq.s32.totalorder %s155, 0
      %s158 = sadd.s32 %s157, 1
      %s159 = scalar_select %p156, %s157, %s158
      %p162 = pneg %p156
      %p163 = scmp.eq.s32.totalorder %s16, 1
      %p164 = por %p162, %p163
      %p165 = scmp.ne.s32.totalorder %s157, %s160
      %p166 = scmp.eq.s32.totalorder %s16, 0
      %p167 = por %p165, %p166
      %p168 = scmp.ne.s32.totalorder %s157, %s160
      %p169 = scmp.eq.s32.totalorder %s21, 1
      %p170 = por %p168, %p169
      %p171 = scmp.ne.s32.totalorder %s160, %s161
      %p172 = scmp.eq.s32.totalorder %s21, 0
      %p173 = por %p171, %p172
      %p174 = scmp.ne.s32.totalorder %s160, %s161
      %p175 = scmp.eq.s32.totalorder %s22, 1
      %p176 = por %p174, %p175
      %p178 = scmp.ne.s32.totalorder %s161, %s177
      %p179 = scmp.eq.s32.totalorder %s22, 0
      %p180 = por %p178, %p179
      %p181 = scmp.le.s32.totalorder 1, %s16
      %p182 = scmp.lt.s32.totalorder %s16, 3
      %p183 = pnand %p181, %p182
      %p184 = pneg %p183
      // Predicated region
      $region9: #{quant_msa_forward.1} parent=5 // pred_check
        _
      $region10: #{quant_msa_forward.1} parent=5 // pred_check_branch
        %186 = sbr.rel (%p183) target = $region12
      $region11: #{quant_msa_forward.1} parent=5 // pred_region
        %s187 = ssub.s32 %s16, 1
        // Predicated region
        $region13: #{quant_msa_forward.1} parent=11 // pred_check
          %p188 = pneg %p37
        $region14: #{quant_msa_forward.1} parent=11 // pred_check_branch
          %190 = sbr.rel (%p188) target = $region16
        $region15: #{quant_msa_forward.1} parent=11 // pred_region
          %192 = vsyncadd [#allocation5], 0
          %s194 = sshll.u32 %s0, 4
          %s195 = int_to_ptr.vmem [resolvable:$true] %s194
          %197 = dma.vmem_to_smem %s195, 16, [#allocation3], [#allocation5]
        $region16: #{quant_msa_forward.1} parent=11 // pred_fallthru
          _
        // Predicated region
        $region17: #{quant_msa_forward.1} parent=11 // pred_check
          %p198 = pneg %p84
        $region18: #{quant_msa_forward.1} parent=11 // pred_check_branch
          %200 = sbr.rel (%p198) target = $region20
        $region19: #{quant_msa_forward.1} parent=11 // pred_region
          _
        $region20: #{quant_msa_forward.1} parent=11 // pred_fallthru
          _
        // Predicated region
        $region21: #{quant_msa_forward.1} parent=11 // pred_check
          %p201 = pneg %p105
        $region22: #{quant_msa_forward.1} parent=11 // pred_check_branch
          %203 = sbr.rel (%p201) target = $region24
        $region23: #{quant_msa_forward.1} parent=11 // pred_region
          _
        $region24: #{quant_msa_forward.1} parent=11 // pred_fallthru
          _
        // Predicated region
        $region25: #{quant_msa_forward.1} parent=11 // pred_check
          %p204 = pneg %p126
        $region26: #{quant_msa_forward.1} parent=11 // pred_check_branch
          %206 = sbr.rel (%p204) target = $region28
        $region27: #{quant_msa_forward.1} parent=11 // pred_region
          _
        $region28: #{quant_msa_forward.1} parent=11 // pred_fallthru
          _
        // Predicated region
        $region29: #{quant_msa_forward.1} parent=11 // pred_check
          %p207 = pneg %p147
        $region30: #{quant_msa_forward.1} parent=11 // pred_check_branch
          %209 = sbr.rel (%p207) target = $region32
        $region31: #{quant_msa_forward.1} parent=11 // pred_region
          _
        $region32: #{quant_msa_forward.1} parent=11 // pred_fallthru
          _
      $region12: #{quant_msa_forward.1} parent=5 // pred_fallthru
        _
      %p210 = scmp.lt.s32.totalorder %s16, 2
      // Predicated region
      $region33: #{quant_msa_forward.1} parent=5 // pred_check
        %p211 = pneg %p210
      $region34: #{quant_msa_forward.1} parent=5 // pred_check_branch
        %213 = sbr.rel (%p211) target = $region36
      $region35: #{quant_msa_forward.1} parent=5 // pred_region
        // Predicated region
        $region37: #{quant_msa_forward.1} parent=35 // pred_check
          %p214 = pneg %p57
        $region38: #{quant_msa_forward.1} parent=35 // pred_check_branch
          %216 = sbr.rel (%p214) target = $region40
        $region39: #{quant_msa_forward.1} parent=35 // pred_region
          %p217 = scmp.lt.s32.totalorder %s16, 1
          %s218 = scalar_select %p217, %s16, 1
          %s219 = smul.addr %s218, 8
          %s220 = scalar_lea.vmem %s1, %s219
        $region40: #{quant_msa_forward.1} parent=35 // pred_fallthru
          _
      $region36: #{quant_msa_forward.1} parent=5 // pred_fallthru
        _
      %p221 = scmp.le.s32.totalorder 1, %s16
      %p222 = scmp.lt.s32.totalorder %s16, 3
      %p223 = pnand %p221, %p222
      %p224 = pneg %p223
      // Predicated region
      $region41: #{quant_msa_forward.1} parent=5 // pred_check
        _
      $region42: #{quant_msa_forward.1} parent=5 // pred_check_branch
        %226 = sbr.rel (%p223) target = $region44
      $region43: #{quant_msa_forward.1} parent=5 // pred_region
        %s227 = ssub.s32 %s16, 1
        // Predicated region
        $region45: #{quant_msa_forward.1} parent=43 // pred_check
          %p228 = pneg %p37
        $region46: #{quant_msa_forward.1} parent=43 // pred_check_branch
          %230 = sbr.rel (%p228) target = $region48
        $region47: #{quant_msa_forward.1} parent=43 // pred_region
          %232 = dma.done [#allocation5], 16
        $region48: #{quant_msa_forward.1} parent=43 // pred_fallthru
          _
        %233 = sfence
        %p234 = pneg %p37
        %p235 = pneg %p34
        %p236 = scmp.lt.s32.totalorder %s21, 1
        %s237 = scalar_select %p236, %s21, 1
        %s238 = smul.addr %s237, 8
        %s239 = scalar_lea.vmem %s1, %s238
        %p240 = pneg %p63
        %p241 = pneg %p60
        %p242 = pneg %p84
        %p243 = pneg %p81
        %p244 = pneg %p105
        %p245 = pneg %p102
        %p246 = pneg %p126
        %p247 = pneg %p123
        %p248 = pneg %p147
        %p249 = pneg %p144
        %p250 = pneg %p173
        %p251 = pneg %p170
        %s252 = sand.u32 %s160, 1
        %s253 = scalar_lea.sflag [#allocation4], %s252
        %s254 = sand.u32 %s160, 1
        %s255 = smul.addr %s254, 8
        %s256 = scalar_lea.vmem [#allocation6], %s255
        %p257 = scmp.lt.s32.totalorder %s21, 1
        %s258 = scalar_select %p257, %s21, 1
        %s259 = smul.addr %s258, 8
        %s260 = scalar_lea.vmem %s1, %s259
        %s262 = sld [smem:[#allocation3]]
        %s263 = sld [smem:[#allocation3 + $0x1]]
        %s264 = sld [smem:[#allocation3 + $0x2]]
        %v265 = vld [vmem:[%s260] sm:$0xff]
        %v266 = vstv %s262
        %v267 = vmul.f32 %v265, %v266
        %v268 = vround.ne.pseudo %v267
        %v269 = vmax.f32 %v268, -128.0
        %v270 = vmin.f32 %v269, 127.0
        %v271 = vpack.c.bf16 %v270, %v270
        %v272 = vld [vmem:[%s2] sm:$0xff]
        %v273 = vld [vmem:[%s2 + $0x8] sm:$0xf]
        %v274 = vld [vmem:[%s2 + $0xc] sm:$0xff]
        %v275 = vld [vmem:[%s2 + $0x14] sm:$0xf]
        %v276 = vld [vmem:[%s2 + $0x18] sm:$0xff]
        %v277 = vld [vmem:[%s2 + $0x20] sm:$0xf]
        %v278 = vld [vmem:[%s2 + $0x24] sm:$0xff]
        %v279 = vld [vmem:[%s2 + $0x2c] sm:$0xf]
        %v280 = vld [vmem:[%s2 + $0x30] sm:$0xff]
        %v281 = vld [vmem:[%s2 + $0x38] sm:$0xf]
        %v282 = vld [vmem:[%s2 + $0x3c] sm:$0xff]
        %v283 = vld [vmem:[%s2 + $0x44] sm:$0xf]
        %v284 = vld [vmem:[%s2 + $0x48] sm:$0xff]
        %v285 = vld [vmem:[%s2 + $0x50] sm:$0xf]
        %v286 = vld [vmem:[%s2 + $0x54] sm:$0xff]
        %v287 = vld [vmem:[%s2 + $0x5c] sm:$0xf]
        %v288 = vld [vmem:[%s2 + $0x60] sm:$0xff]
        %v289 = vld [vmem:[%s2 + $0x68] sm:$0xf]
        %v290 = vld [vmem:[%s2 + $0x6c] sm:$0xff]
        %v291 = vld [vmem:[%s2 + $0x74] sm:$0xf]
        %v292 = vld [vmem:[%s2 + $0x78] sm:$0xff]
        %v293 = vld [vmem:[%s2 + $0x80] sm:$0xf]
        %v294 = vld [vmem:[%s2 + $0x84] sm:$0xff]
        %v295 = vld [vmem:[%s2 + $0x8c] sm:$0xf]
        %v296 = vld [vmem:[%s3] sm:$0x7]
        %v298 = vperm.slane %v296, 0
        %v299 = vperm.slane %v296, 1
        %v300 = vperm.slane %v296, 2
        %v328 = vunpack.c.l.b16 %v272
        %v329 = vunpack.c.h.b16 %v272
        %v330 = vunpack.c.l.b16 %v273
        %v331 = vunpack.c.l.b16 %v274
        %v332 = vunpack.c.h.b16 %v274
        %v333 = vunpack.c.l.b16 %v275
        %v334 = vunpack.c.l.b16 %v276
        %v335 = vunpack.c.h.b16 %v276
        %v336 = vunpack.c.l.b16 %v277
        %v337 = vunpack.c.l.b16 %v278
        %v338 = vunpack.c.h.b16 %v278
        %v339 = vunpack.c.l.b16 %v279
        %v340 = vunpack.c.l.b16 %v280
        %v341 = vunpack.c.h.b16 %v280
        %v342 = vunpack.c.l.b16 %v281
        %v343 = vunpack.c.l.b16 %v282
        %v344 = vunpack.c.h.b16 %v282
        %v345 = vunpack.c.l.b16 %v283
        %v346 = vunpack.c.l.b16 %v284
        %v347 = vunpack.c.h.b16 %v284
        %v348 = vunpack.c.l.b16 %v285
        %v349 = vunpack.c.l.b16 %v286
        %v350 = vunpack.c.h.b16 %v286
        %v351 = vunpack.c.l.b16 %v287
        %v352 = vunpack.c.l.b16 %v288
        %v353 = vunpack.c.h.b16 %v288
        %v354 = vunpack.c.l.b16 %v289
        %v355 = vunpack.c.l.b16 %v290
        %v356 = vunpack.c.h.b16 %v290
        %v357 = vunpack.c.l.b16 %v291
        %v358 = vunpack.c.l.b16 %v292
        %v359 = vunpack.c.h.b16 %v292
        %v360 = vunpack.c.l.b16 %v293
        %v361 = vunpack.c.l.b16 %v294
        %v362 = vunpack.c.h.b16 %v294
        %v363 = vunpack.c.l.b16 %v295
        %v364 = vpack.c.b16 %v331, %v328
        %v365 = vpack.c.b16 %v332, %v329
        %v366 = vpack.c.b16 %v333, %v330
        %v367 = vpack.c.b16 %v337, %v334
        %v368 = vpack.c.b16 %v338, %v335
        %v369 = vpack.c.b16 %v339, %v336
        %v370 = vpack.c.b16 %v343, %v340
        %v371 = vpack.c.b16 %v344, %v341
        %v372 = vpack.c.b16 %v345, %v342
        %v373 = vpack.c.b16 %v349, %v346
        %v374 = vpack.c.b16 %v350, %v347
        %v375 = vpack.c.b16 %v351, %v348
        %v376 = vpack.c.b16 %v355, %v352
        %v377 = vpack.c.b16 %v356, %v353
        %v378 = vpack.c.b16 %v357, %v354
        %v379 = vpack.c.b16 %v361, %v358
        %v380 = vpack.c.b16 %v362, %v359
        %v381 = vpack.c.b16 %v363, %v360
        %vm400 = vcmask 785408
        %v402 = vsel %vm400, %v271, 0
        %404 = vmatpush.bf16.msra.mxu0 0
        %405 = vmatpush.bf16.msra.mxu0 0
        %406 = vmatpush.bf16.msra.mxu0 %v379
        %407 = vmatpush.bf16.msra.mxu0 %v376
        %408 = vmatpush.bf16.msra.mxu0 %v373
        %409 = vmatpush.bf16.msra.mxu0 %v370
        %410 = vmatpush.bf16.msra.mxu0 %v367
        %411 = vmatpush.bf16.msra.mxu0 %v364
        %412 = vmatmul.bf16.gmra.mxu0 %v402
        %v413 = vpop.f32.mrf.mxu0
        %v414 = vadd.f32 %v298, %v413
        %v415 = vpop.f32.mrf.mxu0
        %416 = vdwg.mxu0
        %417 = vmatpush.bf16.msra.mxu0 0
        %418 = vmatpush.bf16.msra.mxu0 0
        %419 = vmatpush.bf16.msra.mxu0 %v380
        %420 = vmatpush.bf16.msra.mxu0 %v377
        %421 = vmatpush.bf16.msra.mxu0 %v374
        %422 = vmatpush.bf16.msra.mxu0 %v371
        %423 = vmatpush.bf16.msra.mxu0 %v368
        %424 = vmatpush.bf16.msra.mxu0 %v365
        %425 = vmatmul.bf16.gmra.mxu0 %v402
        %v426 = vpop.f32.mrf.mxu0
        %v427 = vadd.f32 %v299, %v426
        %v428 = vpop.f32.mrf.mxu0
        %429 = vdwg.mxu0
        %430 = vmatpush.bf16.msra.mxu0 0
        %431 = vmatpush.bf16.msra.mxu0 0
        %432 = vmatpush.bf16.msra.mxu0 %v381
        %433 = vmatpush.bf16.msra.mxu0 %v378
        %434 = vmatpush.bf16.msra.mxu0 %v375
        %435 = vmatpush.bf16.msra.mxu0 %v372
        %436 = vmatpush.bf16.msra.mxu0 %v369
        %437 = vmatpush.bf16.msra.mxu0 %v366
        %438 = vmatmul.bf16.gmra.mxu0 %v402
        %v439 = vpop.f32.mrf.mxu0
        %v440 = vadd.f32 %v300, %v439
        %v441 = vpop.f32.mrf.mxu0
        %442 = vdwg.mxu0
        %v443 = vstv %s263
        %v444 = vmul.f32 %v414, %v443
        %v445 = vmul.f32 %v427, %v443
        %v446 = vmul.f32 %v440, %v443
        %v447 = vround.ne.pseudo %v444
        %v448 = vround.ne.pseudo %v445
        %v449 = vround.ne.pseudo %v446
        %v450 = vmax.f32 %v447, -128.0
        %v451 = vmax.f32 %v448, -128.0
        %v452 = vmax.f32 %v449, -128.0
        %v453 = vmin.f32 %v450, 127.0
        %v454 = vmin.f32 %v451, 127.0
        %v455 = vmin.f32 %v452, 127.0
        %v456 = vpack.c.bf16 %v454, %v453
        %v457 = vpack.c.bf16 %v455, %v455
        %v459 = vunpack.c.l.b16 %v456
        %v460 = vpack.c.b16 %v459, %v459
        %461 = vrot.lane.b32.xlu0 %v460, 32
        %v462 = vpop.permute.xlu0 %461
        %vm463 = vcmask 64512
        %v465 = vsel %vm463, %v456, 0
        %v468 = vsel %vm463, %v462, 0
        %470 = vmatpush.bf16.xpose.msra.mxu0 0
        %471 = vmatpush.bf16.xpose.msra.mxu0 0
        %472 = vmatpush.bf16.xpose.msra.mxu0 0
        %473 = vmatpush.bf16.xpose.msra.mxu0 0
        %474 = vmatpush.bf16.xpose.msra.mxu0 0
        %475 = vmatpush.bf16.xpose.msra.mxu0 0
        %476 = vmatpush.bf16.xpose.msra.mxu0 0
        %477 = vmatpush.bf16.xpose.msra.mxu0 %v468
        %478 = vmatmul.bf16.gmra.mxu0 %v465
        %v479 = vpop.f32.mrf.mxu0
        %v480 = vadd.f32 0.0, %v479
        %v481 = vpop.f32.mrf.mxu0
        %482 = vdwg.mxu0
        %v483 = vmul.f32 %v480, 0.0070710676
        %v484 = vround.ne.pseudo %v483
        %v485 = vmax.f32 %v484, -128.0
        %v486 = vmin.f32 %v485, 127.0
        %v487 = vmul.f32 %v486, 0.02
        %v488 = vsel %vm463, %v487, -inf
        %489 = vmax.xlane.f32.xlu0 %v488
        %v490 = vpop.xlane.xlu0 %489
        %v491 = vsub.f32 %v487, %v490
        %v492 = vmul.f32 %v491, 1.442695
        %v493 = vpow.pop %v492
        %v494 = vsel %vm463, %v493, 0.0
        %495 = vadd.xlane.f32.xlu0 %v494
        %v496 = vpop.xlane.xlu0 %495
        %v497 = vrcp.pop %v496
        %v498 = vmul.f32 %v493, %v497
        %v499 = vmul.f32 %v498, 32767.0
        %v500 = vround.ne.pseudo %v499
        %v501 = vmax.f32 %v500, 0.0
        %v502 = vmin.f32 %v501, 32767.0
        %v503 = vmul.f32 %v502, 0.0038758507
        %v504 = vround.ne.pseudo %v503
        %v505 = vmax.f32 %v504, 0.0
        %v506 = vmin.f32 %v505, 127.0
        %v507 = vpack.c.bf16 %v506, %v506
        %v508 = vunpack.c.h.b16 %v456
        %v509 = vpack.c.b16 %v508, %v508
        %510 = vrot.lane.b32.xlu0 %v509, 64
        %v511 = vpop.permute.xlu0 %510
        %v513 = vsel %vm463, %v507, 0
        %vm515 = vcmask 1043456
        %v517 = vsel %vm515, %v511, 0
        %519 = vmatpush.bf16.msra.mxu0 0
        %520 = vmatpush.bf16.msra.mxu0 0
        %521 = vmatpush.bf16.msra.mxu0 0
        %522 = vmatpush.bf16.msra.mxu0 0
        %523 = vmatpush.bf16.msra.mxu0 0
        %524 = vmatpush.bf16.msra.mxu0 0
        %525 = vmatpush.bf16.msra.mxu0 0
        %526 = vmatpush.bf16.msra.mxu0 %v517
        %527 = vmatmul.bf16.gmra.mxu0 %v513
        %v528 = vpop.f32.mrf.mxu0
        %v529 = vadd.f32 0.0, %v528
        %v530 = vpop.f32.mrf.mxu0
        %531 = vdwg.mxu0
        %v532 = vmul.f32 %v529, 0.015748031
        %v533 = vround.ne.pseudo %v532
        %v534 = vmax.f32 %v533, -128.0
        %v535 = vmin.f32 %v534, 127.0
        %536 = vst.msk [vmem:[#allocation2] sm:$0xff] %vm463, %v535
        %537 = vrot.lane.b32.xlu0 %v460, 120
        %v538 = vpop.permute.xlu0 %537
        %539 = vrot.lane.b32.xlu0 %v460, 24
        %v540 = vpop.permute.xlu0 %539
        %v542 = vsel %vm463, %v538, 0
        %v545 = vsel %vm463, %v540, 0
        %547 = vmatpush.bf16.xpose.msra.mxu0 0
        %548 = vmatpush.bf16.xpose.msra.mxu0 0
        %549 = vmatpush.bf16.xpose.msra.mxu0 0
        %550 = vmatpush.bf16.xpose.msra.mxu0 0
        %551 = vmatpush.bf16.xpose.msra.mxu0 0
        %552 = vmatpush.bf16.xpose.msra.mxu0 0
        %553 = vmatpush.bf16.xpose.msra.mxu0 0
        %554 = vmatpush.bf16.xpose.msra.mxu0 %v545
        %555 = vmatmul.bf16.gmra.mxu0 %v542
        %v556 = vpop.f32.mrf.mxu0
        %v557 = vadd.f32 0.0, %v556
        %v558 = vpop.f32.mrf.mxu0
        %559 = vdwg.mxu0
        %v560 = vmul.f32 %v557, 0.0070710676
        %v561 = vround.ne.pseudo %v560
        %v562 = vmax.f32 %v561, -128.0
        %v563 = vmin.f32 %v562, 127.0
        %v564 = vmul.f32 %v563, 0.02
        %v565 = vsel %vm463, %v564, -inf
        %566 = vmax.xlane.f32.xlu0 %v565
        %v567 = vpop.xlane.xlu0 %566
        %v568 = vsub.f32 %v564, %v567
        %v569 = vmul.f32 %v568, 1.442695
        %v570 = vpow.pop %v569
        %v571 = vsel %vm463, %v570, 0.0
        %572 = vadd.xlane.f32.xlu0 %v571
        %v573 = vpop.xlane.xlu0 %572
        %v574 = vrcp.pop %v573
        %v575 = vmul.f32 %v570, %v574
        %v576 = vmul.f32 %v575, 32767.0
        %v577 = vround.ne.pseudo %v576
        %v578 = vmax.f32 %v577, 0.0
        %v579 = vmin.f32 %v578, 32767.0
        %v580 = vmul.f32 %v579, 0.0038758507
        %v581 = vround.ne.pseudo %v580
        %v582 = vmax.f32 %v581, 0.0
        %v583 = vmin.f32 %v582, 127.0
        %v584 = vpack.c.bf16 %v583, %v583
        %585 = vrot.lane.b32.xlu0 %v509, 56
        %v586 = vpop.permute.xlu0 %585
        %v588 = vsel %vm463, %v584, 0
        %v591 = vsel %vm515, %v586, 0
        %593 = vmatpush.bf16.msra.mxu0 0
        %594 = vmatpush.bf16.msra.mxu0 0
        %595 = vmatpush.bf16.msra.mxu0 0
        %596 = vmatpush.bf16.msra.mxu0 0
        %597 = vmatpush.bf16.msra.mxu0 0
        %598 = vmatpush.bf16.msra.mxu0 0
        %599 = vmatpush.bf16.msra.mxu0 0
        %600 = vmatpush.bf16.msra.mxu0 %v591
        %601 = vmatmul.bf16.gmra.mxu0 %v588
        %v602 = vpop.f32.mrf.mxu0
        %v603 = vadd.f32 0.0, %v602
        %v604 = vpop.f32.mrf.mxu0
        %605 = vdwg.mxu0
        %v606 = vmul.f32 %v603, 0.015748031
        %v607 = vround.ne.pseudo %v606
        %v608 = vmax.f32 %v607, -128.0
        %v609 = vmin.f32 %v608, 127.0
        %611 = vrot.lane.b32.xlu0 %v609, 8
        %v612 = vpop.permute.xlu0 %611
        %vm614 = vcmask 130112
        %615 = vst.msk [vmem:[#allocation2] sm:$0xff] %vm614, %v612
        %616 = vrot.lane.b32.xlu0 %v460, 112
        %v617 = vpop.permute.xlu0 %616
        %618 = vrot.lane.b32.xlu0 %v460, 16
        %v619 = vpop.permute.xlu0 %618
        %v621 = vsel %vm463, %v617, 0
        %v624 = vsel %vm463, %v619, 0
        %626 = vmatpush.bf16.xpose.msra.mxu0 0
        %627 = vmatpush.bf16.xpose.msra.mxu0 0
        %628 = vmatpush.bf16.xpose.msra.mxu0 0
        %629 = vmatpush.bf16.xpose.msra.mxu0 0
        %630 = vmatpush.bf16.xpose.msra.mxu0 0
        %631 = vmatpush.bf16.xpose.msra.mxu0 0
        %632 = vmatpush.bf16.xpose.msra.mxu0 0
        %633 = vmatpush.bf16.xpose.msra.mxu0 %v624
        %634 = vmatmul.bf16.gmra.mxu0 %v621
        %v635 = vpop.f32.mrf.mxu0
        %v636 = vadd.f32 0.0, %v635
        %v637 = vpop.f32.mrf.mxu0
        %638 = vdwg.mxu0
        %v639 = vmul.f32 %v636, 0.0070710676
        %v640 = vround.ne.pseudo %v639
        %v641 = vmax.f32 %v640, -128.0
        %v642 = vmin.f32 %v641, 127.0
        %v643 = vmul.f32 %v642, 0.02
        %v644 = vsel %vm463, %v643, -inf
        %645 = vmax.xlane.f32.xlu0 %v644
        %v646 = vpop.xlane.xlu0 %645
        %v647 = vsub.f32 %v643, %v646
        %v648 = vmul.f32 %v647, 1.442695
        %v649 = vpow.pop %v648
        %v650 = vsel %vm463, %v649, 0.0
        %651 = vadd.xlane.f32.xlu0 %v650
        %v652 = vpop.xlane.xlu0 %651
        %v653 = vrcp.pop %v652
        %v654 = vmul.f32 %v649, %v653
        %v655 = vmul.f32 %v654, 32767.0
        %v656 = vround.ne.pseudo %v655
        %v657 = vmax.f32 %v656, 0.0
        %v658 = vmin.f32 %v657, 32767.0
        %v659 = vmul.f32 %v658, 0.0038758507
        %v660 = vround.ne.pseudo %v659
        %v661 = vmax.f32 %v660, 0.0
        %v662 = vmin.f32 %v661, 127.0
        %v663 = vpack.c.bf16 %v662, %v662
        %664 = vrot.lane.b32.xlu0 %v509, 48
        %v665 = vpop.permute.xlu0 %664
        %v667 = vsel %vm463, %v663, 0
        %v670 = vsel %vm515, %v665, 0
        %672 = vmatpush.bf16.msra.mxu0 0
        %673 = vmatpush.bf16.msra.mxu0 0
        %674 = vmatpush.bf16.msra.mxu0 0
        %675 = vmatpush.bf16.msra.mxu0 0
        %676 = vmatpush.bf16.msra.mxu0 0
        %677 = vmatpush.bf16.msra.mxu0 0
        %678 = vmatpush.bf16.msra.mxu0 0
        %679 = vmatpush.bf16.msra.mxu0 %v670
        %680 = vmatmul.bf16.gmra.mxu0 %v667
        %v681 = vpop.f32.mrf.mxu0
        %v682 = vadd.f32 0.0, %v681
        %v683 = vpop.f32.mrf.mxu0
        %684 = vdwg.mxu0
        %v685 = vmul.f32 %v682, 0.015748031
        %v686 = vround.ne.pseudo %v685
        %v687 = vmax.f32 %v686, -128.0
        %v688 = vmin.f32 %v687, 127.0
        %690 = vrot.lane.b32.xlu0 %v688, 16
        %v691 = vpop.permute.xlu0 %690
        %vm693 = vcmask 195712
        %694 = vst.msk [vmem:[#allocation2] sm:$0xff] %vm693, %v691
        %695 = vrot.lane.b32.xlu0 %v460, 104
        %v696 = vpop.permute.xlu0 %695
        %697 = vrot.lane.b32.xlu0 %v460, 8
        %v698 = vpop.permute.xlu0 %697
        %v700 = vsel %vm463, %v696, 0
        %v703 = vsel %vm463, %v698, 0
        %705 = vmatpush.bf16.xpose.msra.mxu0 0
        %706 = vmatpush.bf16.xpose.msra.mxu0 0
        %707 = vmatpush.bf16.xpose.msra.mxu0 0
        %708 = vmatpush.bf16.xpose.msra.mxu0 0
        %709 = vmatpush.bf16.xpose.msra.mxu0 0
        %710 = vmatpush.bf16.xpose.msra.mxu0 0
        %711 = vmatpush.bf16.xpose.msra.mxu0 0
        %712 = vmatpush.bf16.xpose.msra.mxu0 %v703
        %713 = vmatmul.bf16.gmra.mxu0 %v700
        %v714 = vpop.f32.mrf.mxu0
        %v715 = vadd.f32 0.0, %v714
        %v716 = vpop.f32.mrf.mxu0
        %717 = vdwg.mxu0
        %v718 = vmul.f32 %v715, 0.0070710676
        %v719 = vround.ne.pseudo %v718
        %v720 = vmax.f32 %v719, -128.0
        %v721 = vmin.f32 %v720, 127.0
        %v722 = vmul.f32 %v721, 0.02
        %v723 = vsel %vm463, %v722, -inf
        %724 = vmax.xlane.f32.xlu0 %v723
        %v725 = vpop.xlane.xlu0 %724
        %v726 = vsub.f32 %v722, %v725
        %v727 = vmul.f32 %v726, 1.442695
        %v728 = vpow.pop %v727
        %v729 = vsel %vm463, %v728, 0.0
        %730 = vadd.xlane.f32.xlu0 %v729
        %v731 = vpop.xlane.xlu0 %730
        %v732 = vrcp.pop %v731
        %v733 = vmul.f32 %v728, %v732
        %v734 = vmul.f32 %v733, 32767.0
        %v735 = vround.ne.pseudo %v734
        %v736 = vmax.f32 %v735, 0.0
        %v737 = vmin.f32 %v736, 32767.0
        %v738 = vmul.f32 %v737, 0.0038758507
        %v739 = vround.ne.pseudo %v738
        %v740 = vmax.f32 %v739, 0.0
        %v741 = vmin.f32 %v740, 127.0
        %v742 = vpack.c.bf16 %v741, %v741
        %743 = vrot.lane.b32.xlu0 %v509, 40
        %v744 = vpop.permute.xlu0 %743
        %v746 = vsel %vm463, %v742, 0
        %v749 = vsel %vm515, %v744, 0
        %751 = vmatpush.bf16.msra.mxu0 0
        %752 = vmatpush.bf16.msra.mxu0 0
        %753 = vmatpush.bf16.msra.mxu0 0
        %754 = vmatpush.bf16.msra.mxu0 0
        %755 = vmatpush.bf16.msra.mxu0 0
        %756 = vmatpush.bf16.msra.mxu0 0
        %757 = vmatpush.bf16.msra.mxu0 0
        %758 = vmatpush.bf16.msra.mxu0 %v749
        %759 = vmatmul.bf16.gmra.mxu0 %v746
        %v760 = vpop.f32.mrf.mxu0
        %v761 = vadd.f32 0.0, %v760
        %v762 = vpop.f32.mrf.mxu0
        %763 = vdwg.mxu0
        %v764 = vmul.f32 %v761, 0.015748031
        %v765 = vround.ne.pseudo %v764
        %v766 = vmax.f32 %v765, -128.0
        %v767 = vmin.f32 %v766, 127.0
        %769 = vrot.lane.b32.xlu0 %v767, 24
        %v770 = vpop.permute.xlu0 %769
        %vm772 = vcmask 261312
        %773 = vst.msk [vmem:[#allocation2] sm:$0xff] %vm772, %v770
        %774 = vrot.lane.b32.xlu0 %v460, 96
        %v775 = vpop.permute.xlu0 %774
        %v777 = vsel %vm463, %v775, 0
        %v780 = vsel %vm463, %v509, 0
        %782 = vmatpush.bf16.xpose.msra.mxu0 0
        %783 = vmatpush.bf16.xpose.msra.mxu0 0
        %784 = vmatpush.bf16.xpose.msra.mxu0 0
        %785 = vmatpush.bf16.xpose.msra.mxu0 0
        %786 = vmatpush.bf16.xpose.msra.mxu0 0
        %787 = vmatpush.bf16.xpose.msra.mxu0 0
        %788 = vmatpush.bf16.xpose.msra.mxu0 0
        %789 = vmatpush.bf16.xpose.msra.mxu0 %v780
        %790 = vmatmul.bf16.gmra.mxu0 %v777
        %v791 = vpop.f32.mrf.mxu0
        %v792 = vadd.f32 0.0, %v791
        %v793 = vpop.f32.mrf.mxu0
        %794 = vdwg.mxu0
        %v795 = vmul.f32 %v792, 0.0070710676
        %v796 = vround.ne.pseudo %v795
        %v797 = vmax.f32 %v796, -128.0
        %v798 = vmin.f32 %v797, 127.0
        %v799 = vmul.f32 %v798, 0.02
        %v800 = vsel %vm463, %v799, -inf
        %801 = vmax.xlane.f32.xlu0 %v800
        %v802 = vpop.xlane.xlu0 %801
        %v803 = vsub.f32 %v799, %v802
        %v804 = vmul.f32 %v803, 1.442695
        %v805 = vpow.pop %v804
        %v806 = vsel %vm463, %v805, 0.0
        %807 = vadd.xlane.f32.xlu0 %v806
        %v808 = vpop.xlane.xlu0 %807
        %v809 = vrcp.pop %v808
        %v810 = vmul.f32 %v805, %v809
        %v811 = vmul.f32 %v810, 32767.0
        %v812 = vround.ne.pseudo %v811
        %v813 = vmax.f32 %v812, 0.0
        %v814 = vmin.f32 %v813, 32767.0
        %v815 = vmul.f32 %v814, 0.0038758507
        %v816 = vround.ne.pseudo %v815
        %v817 = vmax.f32 %v816, 0.0
        %v818 = vmin.f32 %v817, 127.0
        %v819 = vpack.c.bf16 %v818, %v818
        %820 = vrot.lane.b32.xlu0 %v509, 32
        %v821 = vpop.permute.xlu0 %820
        %v823 = vsel %vm463, %v819, 0
        %v826 = vsel %vm515, %v821, 0
        %828 = vmatpush.bf16.msra.mxu0 0
        %829 = vmatpush.bf16.msra.mxu0 0
        %830 = vmatpush.bf16.msra.mxu0 0
        %831 = vmatpush.bf16.msra.mxu0 0
        %832 = vmatpush.bf16.msra.mxu0 0
        %833 = vmatpush.bf16.msra.mxu0 0
        %834 = vmatpush.bf16.msra.mxu0 0
        %835 = vmatpush.bf16.msra.mxu0 %v826
        %836 = vmatmul.bf16.gmra.mxu0 %v823
        %v837 = vpop.f32.mrf.mxu0
        %v838 = vadd.f32 0.0, %v837
        %v839 = vpop.f32.mrf.mxu0
        %840 = vdwg.mxu0
        %v841 = vmul.f32 %v838, 0.015748031
        %v842 = vround.ne.pseudo %v841
        %v843 = vmax.f32 %v842, -128.0
        %v844 = vmin.f32 %v843, 127.0
        %846 = vrot.lane.b32.xlu0 %v844, 32
        %v847 = vpop.permute.xlu0 %846
        %vm849 = vcmask 326912
        %850 = vst.msk [vmem:[#allocation2] sm:$0xff] %vm849, %v847
        %851 = vrot.lane.b32.xlu0 %v460, 88
        %v852 = vpop.permute.xlu0 %851
        %853 = vrot.lane.b32.xlu0 %v509, 120
        %v854 = vpop.permute.xlu0 %853
        %v856 = vsel %vm463, %v852, 0
        %v859 = vsel %vm463, %v854, 0
        %861 = vmatpush.bf16.xpose.msra.mxu0 0
        %862 = vmatpush.bf16.xpose.msra.mxu0 0
        %863 = vmatpush.bf16.xpose.msra.mxu0 0
        %864 = vmatpush.bf16.xpose.msra.mxu0 0
        %865 = vmatpush.bf16.xpose.msra.mxu0 0
        %866 = vmatpush.bf16.xpose.msra.mxu0 0
        %867 = vmatpush.bf16.xpose.msra.mxu0 0
        %868 = vmatpush.bf16.xpose.msra.mxu0 %v859
        %869 = vmatmul.bf16.gmra.mxu0 %v856
        %v870 = vpop.f32.mrf.mxu0
        %v871 = vadd.f32 0.0, %v870
        %v872 = vpop.f32.mrf.mxu0
        %873 = vdwg.mxu0
        %v874 = vmul.f32 %v871, 0.0070710676
        %v875 = vround.ne.pseudo %v874
        %v876 = vmax.f32 %v875, -128.0
        %v877 = vmin.f32 %v876, 127.0
        %v878 = vmul.f32 %v877, 0.02
        %v879 = vsel %vm463, %v878, -inf
        %880 = vmax.xlane.f32.xlu0 %v879
        %v881 = vpop.xlane.xlu0 %880
        %v882 = vsub.f32 %v878, %v881
        %v883 = vmul.f32 %v882, 1.442695
        %v884 = vpow.pop %v883
        %v885 = vsel %vm463, %v884, 0.0
        %886 = vadd.xlane.f32.xlu0 %v885
        %v887 = vpop.xlane.xlu0 %886
        %v888 = vrcp.pop %v887
        %v889 = vmul.f32 %v884, %v888
        %v890 = vmul.f32 %v889, 32767.0
        %v891 = vround.ne.pseudo %v890
        %v892 = vmax.f32 %v891, 0.0
        %v893 = vmin.f32 %v892, 32767.0
        %v894 = vmul.f32 %v893, 0.0038758507
        %v895 = vround.ne.pseudo %v894
        %v896 = vmax.f32 %v895, 0.0
        %v897 = vmin.f32 %v896, 127.0
        %v898 = vpack.c.bf16 %v897, %v897
        %899 = vrot.lane.b32.xlu0 %v509, 24
        %v900 = vpop.permute.xlu0 %899
        %v902 = vsel %vm463, %v898, 0
        %v905 = vsel %vm515, %v900, 0
        %907 = vmatpush.bf16.msra.mxu0 0
        %908 = vmatpush.bf16.msra.mxu0 0
        %909 = vmatpush.bf16.msra.mxu0 0
        %910 = vmatpush.bf16.msra.mxu0 0
        %911 = vmatpush.bf16.msra.mxu0 0
        %912 = vmatpush.bf16.msra.mxu0 0
        %913 = vmatpush.bf16.msra.mxu0 0
        %914 = vmatpush.bf16.msra.mxu0 %v905
        %915 = vmatmul.bf16.gmra.mxu0 %v902
        %v916 = vpop.f32.mrf.mxu0
        %v917 = vadd.f32 0.0, %v916
        %v918 = vpop.f32.mrf.mxu0
        %919 = vdwg.mxu0
        %v920 = vmul.f32 %v917, 0.015748031
        %v921 = vround.ne.pseudo %v920
        %v922 = vmax.f32 %v921, -128.0
        %v923 = vmin.f32 %v922, 127.0
        %925 = vrot.lane.b32.xlu0 %v923, 40
        %v926 = vpop.permute.xlu0 %925
        %vm928 = vcmask 392512
        %929 = vst.msk [vmem:[#allocation2] sm:$0xff] %vm928, %v926
        %930 = vrot.lane.b32.xlu0 %v460, 80
        %v931 = vpop.permute.xlu0 %930
        %932 = vrot.lane.b32.xlu0 %v509, 112
        %v933 = vpop.permute.xlu0 %932
        %v935 = vsel %vm463, %v931, 0
        %v938 = vsel %vm463, %v933, 0
        %940 = vmatpush.bf16.xpose.msra.mxu0 0
        %941 = vmatpush.bf16.xpose.msra.mxu0 0
        %942 = vmatpush.bf16.xpose.msra.mxu0 0
        %943 = vmatpush.bf16.xpose.msra.mxu0 0
        %944 = vmatpush.bf16.xpose.msra.mxu0 0
        %945 = vmatpush.bf16.xpose.msra.mxu0 0
        %946 = vmatpush.bf16.xpose.msra.mxu0 0
        %947 = vmatpush.bf16.xpose.msra.mxu0 %v938
        %948 = vmatmul.bf16.gmra.mxu0 %v935
        %v949 = vpop.f32.mrf.mxu0
        %v950 = vadd.f32 0.0, %v949
        %v951 = vpop.f32.mrf.mxu0
        %952 = vdwg.mxu0
        %v953 = vmul.f32 %v950, 0.0070710676
        %v954 = vround.ne.pseudo %v953
        %v955 = vmax.f32 %v954, -128.0
        %v956 = vmin.f32 %v955, 127.0
        %v957 = vmul.f32 %v956, 0.02
        %v958 = vsel %vm463, %v957, -inf
        %959 = vmax.xlane.f32.xlu0 %v958
        %v960 = vpop.xlane.xlu0 %959
        %v961 = vsub.f32 %v957, %v960
        %v962 = vmul.f32 %v961, 1.442695
        %v963 = vpow.pop %v962
        %v964 = vsel %vm463, %v963, 0.0
        %965 = vadd.xlane.f32.xlu0 %v964
        %v966 = vpop.xlane.xlu0 %965
        %v967 = vrcp.pop %v966
        %v968 = vmul.f32 %v963, %v967
        %v969 = vmul.f32 %v968, 32767.0
        %v970 = vround.ne.pseudo %v969
        %v971 = vmax.f32 %v970, 0.0
        %v972 = vmin.f32 %v971, 32767.0
        %v973 = vmul.f32 %v972, 0.0038758507
        %v974 = vround.ne.pseudo %v973
        %v975 = vmax.f32 %v974, 0.0
        %v976 = vmin.f32 %v975, 127.0
        %v977 = vpack.c.bf16 %v976, %v976
        %978 = vrot.lane.b32.xlu0 %v509, 16
        %v979 = vpop.permute.xlu0 %978
        %v981 = vsel %vm463, %v977, 0
        %v984 = vsel %vm515, %v979, 0
        %986 = vmatpush.bf16.msra.mxu0 0
        %987 = vmatpush.bf16.msra.mxu0 0
        %988 = vmatpush.bf16.msra.mxu0 0
        %989 = vmatpush.bf16.msra.mxu0 0
        %990 = vmatpush.bf16.msra.mxu0 0
        %991 = vmatpush.bf16.msra.mxu0 0
        %992 = vmatpush.bf16.msra.mxu0 0
        %993 = vmatpush.bf16.msra.mxu0 %v984
        %994 = vmatmul.bf16.gmra.mxu0 %v981
        %v995 = vpop.f32.mrf.mxu0
        %v996 = vadd.f32 0.0, %v995
        %v997 = vpop.f32.mrf.mxu0
        %998 = vdwg.mxu0
        %v999 = vmul.f32 %v996, 0.015748031
        %v1000 = vround.ne.pseudo %v999
        %v1001 = vmax.f32 %v1000, -128.0
        %v1002 = vmin.f32 %v1001, 127.0
        %1004 = vrot.lane.b32.xlu0 %v1002, 48
        %v1005 = vpop.permute.xlu0 %1004
        %vm1007 = vcmask 458112
        %1008 = vst.msk [vmem:[#allocation2] sm:$0xff] %vm1007, %v1005
        %1009 = vrot.lane.b32.xlu0 %v460, 72
        %v1010 = vpop.permute.xlu0 %1009
        %1011 = vrot.lane.b32.xlu0 %v509, 104
        %v1012 = vpop.permute.xlu0 %1011
        %v1014 = vsel %vm463, %v1010, 0
        %v1017 = vsel %vm463, %v1012, 0
        %1019 = vmatpush.bf16.xpose.msra.mxu0 0
        %1020 = vmatpush.bf16.xpose.msra.mxu0 0
        %1021 = vmatpush.bf16.xpose.msra.mxu0 0
        %1022 = vmatpush.bf16.xpose.msra.mxu0 0
        %1023 = vmatpush.bf16.xpose.msra.mxu0 0
        %1024 = vmatpush.bf16.xpose.msra.mxu0 0
        %1025 = vmatpush.bf16.xpose.msra.mxu0 0
        %1026 = vmatpush.bf16.xpose.msra.mxu0 %v1017
        %1027 = vmatmul.bf16.gmra.mxu0 %v1014
        %v1028 = vpop.f32.mrf.mxu0
        %v1029 = vadd.f32 0.0, %v1028
        %v1030 = vpop.f32.mrf.mxu0
        %1031 = vdwg.mxu0
        %v1032 = vmul.f32 %v1029, 0.0070710676
        %v1033 = vround.ne.pseudo %v1032
        %v1034 = vmax.f32 %v1033, -128.0
        %v1035 = vmin.f32 %v1034, 127.0
        %v1036 = vmul.f32 %v1035, 0.02
        %v1037 = vsel %vm463, %v1036, -inf
        %1038 = vmax.xlane.f32.xlu0 %v1037
        %v1039 = vpop.xlane.xlu0 %1038
        %v1040 = vsub.f32 %v1036, %v1039
        %v1041 = vmul.f32 %v1040, 1.442695
        %v1042 = vpow.pop %v1041
        %v1043 = vsel %vm463, %v1042, 0.0
        %1044 = vadd.xlane.f32.xlu0 %v1043
        %v1045 = vpop.xlane.xlu0 %1044
        %v1046 = vrcp.pop %v1045
        %v1047 = vmul.f32 %v1042, %v1046
        %v1048 = vmul.f32 %v1047, 32767.0
        %v1049 = vround.ne.pseudo %v1048
        %v1050 = vmax.f32 %v1049, 0.0
        %v1051 = vmin.f32 %v1050, 32767.0
        %v1052 = vmul.f32 %v1051, 0.0038758507
        %v1053 = vround.ne.pseudo %v1052
        %v1054 = vmax.f32 %v1053, 0.0
        %v1055 = vmin.f32 %v1054, 127.0
        %v1056 = vpack.c.bf16 %v1055, %v1055
        %1057 = vrot.lane.b32.xlu0 %v509, 8
        %v1058 = vpop.permute.xlu0 %1057
        %v1060 = vsel %vm463, %v1056, 0
        %v1063 = vsel %vm515, %v1058, 0
        %1065 = vmatpush.bf16.msra.mxu0 0
        %1066 = vmatpush.bf16.msra.mxu0 0
        %1067 = vmatpush.bf16.msra.mxu0 0
        %1068 = vmatpush.bf16.msra.mxu0 0
        %1069 = vmatpush.bf16.msra.mxu0 0
        %1070 = vmatpush.bf16.msra.mxu0 0
        %1071 = vmatpush.bf16.msra.mxu0 0
        %1072 = vmatpush.bf16.msra.mxu0 %v1063
        %1073 = vmatmul.bf16.gmra.mxu0 %v1060
        %v1074 = vpop.f32.mrf.mxu0
        %v1075 = vadd.f32 0.0, %v1074
        %v1076 = vpop.f32.mrf.mxu0
        %1077 = vdwg.mxu0
        %v1078 = vmul.f32 %v1075, 0.015748031
        %v1079 = vround.ne.pseudo %v1078
        %v1080 = vmax.f32 %v1079, -128.0
        %v1081 = vmin.f32 %v1080, 127.0
        %1083 = vrot.lane.b32.xlu0 %v1081, 56
        %v1084 = vpop.permute.xlu0 %1083
        %vm1086 = vcmask 523712
        %1087 = vst.msk [vmem:[#allocation2] sm:$0xff] %vm1086, %v1084
        %1088 = vrot.lane.b32.xlu0 %v460, 64
        %v1089 = vpop.permute.xlu0 %1088
        %1090 = vrot.lane.b32.xlu0 %v509, 96
        %v1091 = vpop.permute.xlu0 %1090
        %v1093 = vsel %vm463, %v1089, 0
        %v1096 = vsel %vm463, %v1091, 0
        %1098 = vmatpush.bf16.xpose.msra.mxu0 0
        %1099 = vmatpush.bf16.xpose.msra.mxu0 0
        %1100 = vmatpush.bf16.xpose.msra.mxu0 0
        %1101 = vmatpush.bf16.xpose.msra.mxu0 0
        %1102 = vmatpush.bf16.xpose.msra.mxu0 0
        %1103 = vmatpush.bf16.xpose.msra.mxu0 0
        %1104 = vmatpush.bf16.xpose.msra.mxu0 0
        %1105 = vmatpush.bf16.xpose.msra.mxu0 %v1096
        %1106 = vmatmul.bf16.gmra.mxu0 %v1093
        %v1107 = vpop.f32.mrf.mxu0
        %v1108 = vadd.f32 0.0, %v1107
        %v1109 = vpop.f32.mrf.mxu0
        %1110 = vdwg.mxu0
        %v1111 = vmul.f32 %v1108, 0.0070710676
        %v1112 = vround.ne.pseudo %v1111
        %v1113 = vmax.f32 %v1112, -128.0
        %v1114 = vmin.f32 %v1113, 127.0
        %v1115 = vmul.f32 %v1114, 0.02
        %v1116 = vsel %vm463, %v1115, -inf
        %1117 = vmax.xlane.f32.xlu0 %v1116
        %v1118 = vpop.xlane.xlu0 %1117
        %v1119 = vsub.f32 %v1115, %v1118
        %v1120 = vmul.f32 %v1119, 1.442695
        %v1121 = vpow.pop %v1120
        %v1122 = vsel %vm463, %v1121, 0.0
        %1123 = vadd.xlane.f32.xlu0 %v1122
        %v1124 = vpop.xlane.xlu0 %1123
        %v1125 = vrcp.pop %v1124
        %v1126 = vmul.f32 %v1121, %v1125
        %v1127 = vmul.f32 %v1126, 32767.0
        %v1128 = vround.ne.pseudo %v1127
        %v1129 = vmax.f32 %v1128, 0.0
        %v1130 = vmin.f32 %v1129, 32767.0
        %v1131 = vmul.f32 %v1130, 0.0038758507
        %v1132 = vround.ne.pseudo %v1131
        %v1133 = vmax.f32 %v1132, 0.0
        %v1134 = vmin.f32 %v1133, 127.0
        %v1135 = vpack.c.bf16 %v1134, %v1134
        %v1137 = vsel %vm463, %v1135, 0
        %v1140 = vsel %vm515, %v457, 0
        %1142 = vmatpush.bf16.msra.mxu0 0
        %1143 = vmatpush.bf16.msra.mxu0 0
        %1144 = vmatpush.bf16.msra.mxu0 0
        %1145 = vmatpush.bf16.msra.mxu0 0
        %1146 = vmatpush.bf16.msra.mxu0 0
        %1147 = vmatpush.bf16.msra.mxu0 0
        %1148 = vmatpush.bf16.msra.mxu0 0
        %1149 = vmatpush.bf16.msra.mxu0 %v1140
        %1150 = vmatmul.bf16.gmra.mxu0 %v1137
        %v1151 = vpop.f32.mrf.mxu0
        %v1152 = vadd.f32 0.0, %v1151
        %v1153 = vpop.f32.mrf.mxu0
        %1154 = vdwg.mxu0
        %v1155 = vmul.f32 %v1152, 0.015748031
        %v1156 = vround.ne.pseudo %v1155
        %v1157 = vmax.f32 %v1156, -128.0
        %v1158 = vmin.f32 %v1157, 127.0
        %1160 = vrot.lane.b32.xlu0 %v1158, 64
        %v1161 = vpop.permute.xlu0 %1160
        %vm1163 = vcmask 589312
        %1164 = vst.msk [vmem:[#allocation2] sm:$0xff] %vm1163, %v1161
        %1165 = vrot.lane.b32.xlu0 %v460, 56
        %v1166 = vpop.permute.xlu0 %1165
        %1167 = vrot.lane.b32.xlu0 %v509, 88
        %v1168 = vpop.permute.xlu0 %1167
        %v1170 = vsel %vm463, %v1166, 0
        %v1173 = vsel %vm463, %v1168, 0
        %1175 = vmatpush.bf16.xpose.msra.mxu0 0
        %1176 = vmatpush.bf16.xpose.msra.mxu0 0
        %1177 = vmatpush.bf16.xpose.msra.mxu0 0
        %1178 = vmatpush.bf16.xpose.msra.mxu0 0
        %1179 = vmatpush.bf16.xpose.msra.mxu0 0
        %1180 = vmatpush.bf16.xpose.msra.mxu0 0
        %1181 = vmatpush.bf16.xpose.msra.mxu0 0
        %1182 = vmatpush.bf16.xpose.msra.mxu0 %v1173
        %1183 = vmatmul.bf16.gmra.mxu0 %v1170
        %v1184 = vpop.f32.mrf.mxu0
        %v1185 = vadd.f32 0.0, %v1184
        %v1186 = vpop.f32.mrf.mxu0
        %1187 = vdwg.mxu0
        %v1188 = vmul.f32 %v1185, 0.0070710676
        %v1189 = vround.ne.pseudo %v1188
        %v1190 = vmax.f32 %v1189, -128.0
        %v1191 = vmin.f32 %v1190, 127.0
        %v1192 = vmul.f32 %v1191, 0.02
        %v1193 = vsel %vm463, %v1192, -inf
        %1194 = vmax.xlane.f32.xlu0 %v1193
        %v1195 = vpop.xlane.xlu0 %1194
        %v1196 = vsub.f32 %v1192, %v1195
        %v1197 = vmul.f32 %v1196, 1.442695
        %v1198 = vpow.pop %v1197
        %v1199 = vsel %vm463, %v1198, 0.0
        %1200 = vadd.xlane.f32.xlu0 %v1199
        %v1201 = vpop.xlane.xlu0 %1200
        %v1202 = vrcp.pop %v1201
        %v1203 = vmul.f32 %v1198, %v1202
        %v1204 = vmul.f32 %v1203, 32767.0
        %v1205 = vround.ne.pseudo %v1204
        %v1206 = vmax.f32 %v1205, 0.0
        %v1207 = vmin.f32 %v1206, 32767.0
        %v1208 = vmul.f32 %v1207, 0.0038758507
        %v1209 = vround.ne.pseudo %v1208
        %v1210 = vmax.f32 %v1209, 0.0
        %v1211 = vmin.f32 %v1210, 127.0
        %v1212 = vpack.c.bf16 %v1211, %v1211
        %v1214 = vunpack.c.l.b16 %v457
        %v1215 = vpack.c.b16 %v1214, %v1214
        %1216 = vrot.lane.b32.xlu0 %v1215, 120
        %v1217 = vpop.permute.xlu0 %1216
        %v1219 = vsel %vm463, %v1212, 0
        %v1222 = vsel %vm515, %v1217, 0
        %1224 = vmatpush.bf16.msra.mxu0 0
        %1225 = vmatpush.bf16.msra.mxu0 0
        %1226 = vmatpush.bf16.msra.mxu0 0
        %1227 = vmatpush.bf16.msra.mxu0 0
        %1228 = vmatpush.bf16.msra.mxu0 0
        %1229 = vmatpush.bf16.msra.mxu0 0
        %1230 = vmatpush.bf16.msra.mxu0 0
        %1231 = vmatpush.bf16.msra.mxu0 %v1222
        %1232 = vmatmul.bf16.gmra.mxu0 %v1219
        %v1233 = vpop.f32.mrf.mxu0
        %v1234 = vadd.f32 0.0, %v1233
        %v1235 = vpop.f32.mrf.mxu0
        %1236 = vdwg.mxu0
        %v1237 = vmul.f32 %v1234, 0.015748031
        %v1238 = vround.ne.pseudo %v1237
        %v1239 = vmax.f32 %v1238, -128.0
        %v1240 = vmin.f32 %v1239, 127.0
        %1242 = vrot.lane.b32.xlu0 %v1240, 72
        %v1243 = vpop.permute.xlu0 %1242
        %vm1245 = vcmask 654912
        %1246 = vst.msk [vmem:[#allocation2] sm:$0xff] %vm1245, %v1243
        %1247 = vrot.lane.b32.xlu0 %v460, 48
        %v1248 = vpop.permute.xlu0 %1247
        %1249 = vrot.lane.b32.xlu0 %v509, 80
        %v1250 = vpop.permute.xlu0 %1249
        %v1252 = vsel %vm463, %v1248, 0
        %v1255 = vsel %vm463, %v1250, 0
        %1257 = vmatpush.bf16.xpose.msra.mxu0 0
        %1258 = vmatpush.bf16.xpose.msra.mxu0 0
        %1259 = vmatpush.bf16.xpose.msra.mxu0 0
        %1260 = vmatpush.bf16.xpose.msra.mxu0 0
        %1261 = vmatpush.bf16.xpose.msra.mxu0 0
        %1262 = vmatpush.bf16.xpose.msra.mxu0 0
        %1263 = vmatpush.bf16.xpose.msra.mxu0 0
        %1264 = vmatpush.bf16.xpose.msra.mxu0 %v1255
        %1265 = vmatmul.bf16.gmra.mxu0 %v1252
        %v1266 = vpop.f32.mrf.mxu0
        %v1267 = vadd.f32 0.0, %v1266
        %v1268 = vpop.f32.mrf.mxu0
        %1269 = vdwg.mxu0
        %v1270 = vmul.f32 %v1267, 0.0070710676
        %v1271 = vround.ne.pseudo %v1270
        %v1272 = vmax.f32 %v1271, -128.0
        %v1273 = vmin.f32 %v1272, 127.0
        %v1274 = vmul.f32 %v1273, 0.02
        %v1275 = vsel %vm463, %v1274, -inf
        %1276 = vmax.xlane.f32.xlu0 %v1275
        %v1277 = vpop.xlane.xlu0 %1276
        %v1278 = vsub.f32 %v1274, %v1277
        %v1279 = vmul.f32 %v1278, 1.442695
        %v1280 = vpow.pop %v1279
        %v1281 = vsel %vm463, %v1280, 0.0
        %1282 = vadd.xlane.f32.xlu0 %v1281
        %v1283 = vpop.xlane.xlu0 %1282
        %v1284 = vrcp.pop %v1283
        %v1285 = vmul.f32 %v1280, %v1284
        %v1286 = vmul.f32 %v1285, 32767.0
        %v1287 = vround.ne.pseudo %v1286
        %v1288 = vmax.f32 %v1287, 0.0
        %v1289 = vmin.f32 %v1288, 32767.0
        %v1290 = vmul.f32 %v1289, 0.0038758507
        %v1291 = vround.ne.pseudo %v1290
        %v1292 = vmax.f32 %v1291, 0.0
        %v1293 = vmin.f32 %v1292, 127.0
        %v1294 = vpack.c.bf16 %v1293, %v1293
        %1295 = vrot.lane.b32.xlu0 %v1215, 112
        %v1296 = vpop.permute.xlu0 %1295
        %v1298 = vsel %vm463, %v1294, 0
        %v1301 = vsel %vm515, %v1296, 0
        %1303 = vmatpush.bf16.msra.mxu0 0
        %1304 = vmatpush.bf16.msra.mxu0 0
        %1305 = vmatpush.bf16.msra.mxu0 0
        %1306 = vmatpush.bf16.msra.mxu0 0
        %1307 = vmatpush.bf16.msra.mxu0 0
        %1308 = vmatpush.bf16.msra.mxu0 0
        %1309 = vmatpush.bf16.msra.mxu0 0
        %1310 = vmatpush.bf16.msra.mxu0 %v1301
        %1311 = vmatmul.bf16.gmra.mxu0 %v1298
        %v1312 = vpop.f32.mrf.mxu0
        %v1313 = vadd.f32 0.0, %v1312
        %v1314 = vpop.f32.mrf.mxu0
        %1315 = vdwg.mxu0
        %v1316 = vmul.f32 %v1313, 0.015748031
        %v1317 = vround.ne.pseudo %v1316
        %v1318 = vmax.f32 %v1317, -128.0
        %v1319 = vmin.f32 %v1318, 127.0
        %1321 = vrot.lane.b32.xlu0 %v1319, 80
        %v1322 = vpop.permute.xlu0 %1321
        %vm1324 = vcmask 720512
        %1325 = vst.msk [vmem:[#allocation2] sm:$0xff] %vm1324, %v1322
        %1326 = vrot.lane.b32.xlu0 %v460, 40
        %v1327 = vpop.permute.xlu0 %1326
        %1328 = vrot.lane.b32.xlu0 %v509, 72
        %v1329 = vpop.permute.xlu0 %1328
        %v1331 = vsel %vm463, %v1327, 0
        %v1334 = vsel %vm463, %v1329, 0
        %1336 = vmatpush.bf16.xpose.msra.mxu0 0
        %1337 = vmatpush.bf16.xpose.msra.mxu0 0
        %1338 = vmatpush.bf16.xpose.msra.mxu0 0
        %1339 = vmatpush.bf16.xpose.msra.mxu0 0
        %1340 = vmatpush.bf16.xpose.msra.mxu0 0
        %1341 = vmatpush.bf16.xpose.msra.mxu0 0
        %1342 = vmatpush.bf16.xpose.msra.mxu0 0
        %1343 = vmatpush.bf16.xpose.msra.mxu0 %v1334
        %1344 = vmatmul.bf16.gmra.mxu0 %v1331
        %v1345 = vpop.f32.mrf.mxu0
        %v1346 = vadd.f32 0.0, %v1345
        %v1347 = vpop.f32.mrf.mxu0
        %1348 = vdwg.mxu0
        %v1349 = vmul.f32 %v1346, 0.0070710676
        %v1350 = vround.ne.pseudo %v1349
        %v1351 = vmax.f32 %v1350, -128.0
        %v1352 = vmin.f32 %v1351, 127.0
        %v1353 = vmul.f32 %v1352, 0.02
        %v1354 = vsel %vm463, %v1353, -inf
        %1355 = vmax.xlane.f32.xlu0 %v1354
        %v1356 = vpop.xlane.xlu0 %1355
        %v1357 = vsub.f32 %v1353, %v1356
        %v1358 = vmul.f32 %v1357, 1.442695
        %v1359 = vpow.pop %v1358
        %v1360 = vsel %vm463, %v1359, 0.0
        %1361 = vadd.xlane.f32.xlu0 %v1360
        %v1362 = vpop.xlane.xlu0 %1361
        %v1363 = vrcp.pop %v1362
        %v1364 = vmul.f32 %v1359, %v1363
        %v1365 = vmul.f32 %v1364, 32767.0
        %v1366 = vround.ne.pseudo %v1365
        %v1367 = vmax.f32 %v1366, 0.0
        %v1368 = vmin.f32 %v1367, 32767.0
        %v1369 = vmul.f32 %v1368, 0.0038758507
        %v1370 = vround.ne.pseudo %v1369
        %v1371 = vmax.f32 %v1370, 0.0
        %v1372 = vmin.f32 %v1371, 127.0
        %v1373 = vpack.c.bf16 %v1372, %v1372
        %1374 = vrot.lane.b32.xlu0 %v1215, 104
        %v1375 = vpop.permute.xlu0 %1374
        %v1377 = vsel %vm463, %v1373, 0
        %v1380 = vsel %vm515, %v1375, 0
        %1382 = vmatpush.bf16.msra.mxu0 0
        %1383 = vmatpush.bf16.msra.mxu0 0
        %1384 = vmatpush.bf16.msra.mxu0 0
        %1385 = vmatpush.bf16.msra.mxu0 0
        %1386 = vmatpush.bf16.msra.mxu0 0
        %1387 = vmatpush.bf16.msra.mxu0 0
        %1388 = vmatpush.bf16.msra.mxu0 0
        %1389 = vmatpush.bf16.msra.mxu0 %v1380
        %1390 = vmatmul.bf16.gmra.mxu0 %v1377
        %v1391 = vpop.f32.mrf.mxu0
        %v1392 = vadd.f32 0.0, %v1391
        %v1393 = vpop.f32.mrf.mxu0
        %1394 = vdwg.mxu0
        %v1395 = vmul.f32 %v1392, 0.015748031
        %v1396 = vround.ne.pseudo %v1395
        %v1397 = vmax.f32 %v1396, -128.0
        %v1398 = vmin.f32 %v1397, 127.0
        %1400 = vrot.lane.b32.xlu0 %v1398, 88
        %v1401 = vpop.permute.xlu0 %1400
        %vm1403 = vcmask 786112
        %1404 = vst.msk [vmem:[#allocation2] sm:$0xff] %vm1403, %v1401
        %v1405 = vld [vmem:[#allocation2] sm:$0xff]
        %v1406 = vpack.c.bf16 %v1405, %v1405
        %v1407 = vld [vmem:[%s4] sm:$0xf]
        %v1408 = vld [vmem:[%s4 + $0x4] sm:$0xf]
        %v1409 = vld [vmem:[%s4 + $0x8] sm:$0xf]
        %v1410 = vld [vmem:[%s4 + $0xc] sm:$0xf]
        %v1411 = vld [vmem:[%s4 + $0x10] sm:$0xf]
        %v1412 = vld [vmem:[%s4 + $0x14] sm:$0xf]
        %v1413 = vld [vmem:[%s4 + $0x18] sm:$0xf]
        %v1414 = vld [vmem:[%s4 + $0x1c] sm:$0xf]
        %v1415 = vld [vmem:[%s4 + $0x20] sm:$0xf]
        %v1416 = vld [vmem:[%s4 + $0x24] sm:$0xf]
        %v1417 = vld [vmem:[%s4 + $0x28] sm:$0xf]
        %v1418 = vld [vmem:[%s4 + $0x2c] sm:$0xf]
        %v1419 = vld [vmem:[%s5] sm:$0x1]
        %v1421 = vperm.slane %v1419, 0
        %v1435 = vunpack.c.l.b16 %v1407
        %v1436 = vunpack.c.l.b16 %v1408
        %v1437 = vunpack.c.l.b16 %v1409
        %v1438 = vunpack.c.l.b16 %v1410
        %v1439 = vunpack.c.l.b16 %v1411
        %v1440 = vunpack.c.l.b16 %v1412
        %v1441 = vunpack.c.l.b16 %v1413
        %v1442 = vunpack.c.l.b16 %v1414
        %v1443 = vunpack.c.l.b16 %v1415
        %v1444 = vunpack.c.l.b16 %v1416
        %v1445 = vunpack.c.l.b16 %v1417
        %v1446 = vunpack.c.l.b16 %v1418
        %v1447 = vpack.c.b16 %v1436, %v1435
        %v1448 = vpack.c.b16 %v1438, %v1437
        %v1449 = vpack.c.b16 %v1440, %v1439
        %v1450 = vpack.c.b16 %v1442, %v1441
        %v1451 = vpack.c.b16 %v1444, %v1443
        %v1452 = vpack.c.b16 %v1446, %v1445
        %v1460 = vsel %vm400, %v1406, 0
        %1462 = vmatpush.bf16.msra.mxu0 0
        %1463 = vmatpush.bf16.msra.mxu0 0
        %1464 = vmatpush.bf16.msra.mxu0 %v1452
        %1465 = vmatpush.bf16.msra.mxu0 %v1451
        %1466 = vmatpush.bf16.msra.mxu0 %v1450
        %1467 = vmatpush.bf16.msra.mxu0 %v1449
        %1468 = vmatpush.bf16.msra.mxu0 %v1448
        %1469 = vmatpush.bf16.msra.mxu0 %v1447
        %1470 = vmatmul.bf16.gmra.mxu0 %v1460
        %v1471 = vpop.f32.mrf.mxu0
        %v1472 = vadd.f32 %v1421, %v1471
        %v1473 = vpop.f32.mrf.mxu0
        %1474 = vdwg.mxu0
        %v1475 = vstv %s264
        %v1476 = vmul.f32 %v1472, %v1475
        %v1477 = vround.ne.pseudo %v1476
        %v1478 = vmax.f32 %v1477, -128.0
        %v1479 = vmin.f32 %v1478, 127.0
        %v1480 = vmul.f32 %v1479, 0.01
        %1481 = vst.msk [vmem:[%s256] sm:$0xff] %vm400, %v1480
        %s1482 = sand.u32 %s160, 1
        %s1483 = scalar_lea.sflag [#allocation4], %s1482
        %s1484 = sand.u32 %s160, 1
        %s1485 = smul.addr %s1484, 8
        %s1486 = scalar_lea.vmem [#allocation6], %s1485
        // Predicated region
        $region49: #{quant_msa_forward.1} parent=43 // pred_check
          %p1487 = pneg %p170
        $region50: #{quant_msa_forward.1} parent=43 // pred_check_branch
          %1489 = sbr.rel (%p1487) target = $region52
        $region51: #{quant_msa_forward.1} parent=43 // pred_region
          %1491 = vsyncadd %s1483, 0
          %s1492 = smul.addr %s21, 8
          %s1493 = scalar_lea.hbm %s6, %s1492
          %s1495 = sshll.u32 %s1486, 4
          %s1496 = int_to_ptr.vmem [resolvable:$true] %s1495
          %s1497 = sshll.u32 %s1493, 4
          %s1498 = int_to_ptr.hbm [resolvable:$true] %s1497
          %1500 = dma.vmem_to_hbm [thread:$0]  %s1496, 128, %s1498, %s1483
        $region52: #{quant_msa_forward.1} parent=43 // pred_fallthru
          _
      $region44: #{quant_msa_forward.1} parent=5 // pred_fallthru
        _
      %p1501 = scmp.le.s32.totalorder 2, %s16
      // Predicated region
      $region53: #{quant_msa_forward.1} parent=5 // pred_check
        %p1502 = pneg %p1501
      $region54: #{quant_msa_forward.1} parent=5 // pred_check_branch
        %1504 = sbr.rel (%p1502) target = $region56
      $region55: #{quant_msa_forward.1} parent=5 // pred_region
        %s1505 = ssub.s32 %s16, 2
        // Predicated region
        $region57: #{quant_msa_forward.1} parent=55 // pred_check
          %p1506 = pneg %p176
        $region58: #{quant_msa_forward.1} parent=55 // pred_check_branch
          %1508 = sbr.rel (%p1506) target = $region60
        $region59: #{quant_msa_forward.1} parent=55 // pred_region
          %s1509 = sand.u32 %s161, 1
          %s1510 = scalar_lea.sflag [#allocation4], %s1509
          %s1511 = sand.u32 %s161, 1
          %s1512 = smul.addr %s1511, 8
          %s1513 = scalar_lea.vmem [#allocation6], %s1512
          %1515 = dma.done %s1510, 128
        $region60: #{quant_msa_forward.1} parent=55 // pred_fallthru
          _
      $region56: #{quant_msa_forward.1} parent=5 // pred_fallthru
        _
    $region6: #{quant_msa_forward.1} parent=1 // loop_footer
      %s20 = sadd.s32 1, %s16
    $region7: #{quant_msa_forward.1} parent=1 // loop_footer_branch
      %15 = sbr.rel target = $region3
    $region8: #{quant_msa_forward.1} parent=1 // loop_exit
      _
    %1516 = vsyncpa [#allocation4], 1
    %s1517 = scalar_lea.sflag [#allocation4], 1
    %1518 = vsyncpa %s1517, 1
    %1519 = vsyncpa [#allocation5], 1
    %s1520 = scalar_lea.sflag [#allocation5], 1
    %1521 = vsyncpa %s1520, 1

</llo_original>
